<compile_context>
chip_gen: v7x
topology: tpu7x:2x2x1
jax: 0.10.0
libtpu: 0.0.40
codegen_flags: <defaults>
</compile_context>

<pallas_src>
import functools

import jax
import jax.numpy as jnp
from jax import lax
from jax.experimental import pallas as pl
from jax.experimental.pallas import tpu as pltpu

_NEG_INF = -1e30


def _rup(x, m):
    return ((x + m - 1) // m) * m


def _mm(a, b, *, trans_b=False, bf16=True):
    """Matmul with f32 accumulation; optional bf16 operand cast (MXU-native)."""
    if bf16:
        a = a.astype(jnp.bfloat16)
        b = b.astype(jnp.bfloat16)
    dims = (((1,), (1,) if trans_b else (0,)), ((), ()))
    return lax.dot_general(a, b, dims, preferred_element_type=jnp.float32)


# -----------------------------------------------------------------------------
# Kernel 1: hetero-graph encoder -> padded node tables (cacheable)
# -----------------------------------------------------------------------------
def make_encoder_kernel(*, n_layer, D, BERT, NC, NQ, CPAD, QPAD, ABLK):
    H = D

    def gat(xs, xd, att_s, att_d, adj, bias):
        """Dense-masked bipartite GATConv (heads=1, add_self_loops=False).

        xs: [Ns,H] projected sources, xd: [Nd,H] projected dests, adj: [Nd,Ns]
        1/0 mask. Zero-in-degree destinations get alpha == 0 (output == bias),
        matching PyG scatter semantics.
        """
        a_s = _mm(att_s, xs, trans_b=True)                 # [1, Ns]
        a_d = jnp.sum(xd * att_d, axis=-1, keepdims=True)  # [Nd, 1]
        e = a_d + a_s                                      # [Nd, Ns]
        e = jnp.where(e > 0, e, 0.2 * e)                   # LeakyReLU(0.2)
        e = jnp.where(adj > 0, e, _NEG_INF)
        m = jnp.max(e, axis=-1, keepdims=True)
        p = jnp.exp(e - m) * adj
        denom = jnp.sum(p, axis=-1, keepdims=True)
        alpha = p / jnp.where(denom == 0.0, 1.0, denom)
        return _mm(alpha, xs) + bias                       # [Nd, H]

    def kernel(xfeat_ref, adjs_ref, wenc_ref, tabs_ref):
        c = xfeat_ref[0:NC, :]                             # [NC, BERT]
        q = xfeat_ref[CPAD:CPAD + NQ, :]                   # [NQ, BERT]
        adj_cc = adjs_ref[0:ABLK, :][0:NC, 0:NC]
        adj_qc = adjs_ref[ABLK:2 * ABLK, :][0:NC, 0:NQ]
        adj_cq = adjs_ref[2 * ABLK:3 * ABLK, :][0:NQ, 0:NC]

        off = 0
        for l in range(n_layer):
            f_in = BERT if l == 0 else D
            wc = wenc_ref[off:off + 5 * H, 0:f_in]; off += 5 * H
            wq = wenc_ref[off:off + 3 * H, 0:f_in]; off += 3 * H
            att = wenc_ref[off:off + 8, 0:D]; off += 8     # rows 0..5 used
            bia = wenc_ref[off:off + 8, 0:D]; off += 8     # rows 0..4 used
            # stacked per-source projections:
            #   wc rows: [w_src_cc; w_dst_cc; w_src_cq; w_dst_qc; w_lin_c]
            #   wq rows: [w_src_qc; w_dst_cq; w_lin_q]
            zc = _mm(c, wc, trans_b=True)                  # [NC, 5H]
            zq = _mm(q, wq, trans_b=True)                  # [NQ, 3H]
            # concept  <- GAT(c->c) + GAT(q->c) + Lin_c(c)  (to_hetero aggr='sum')
            # question <- GAT(c->q) + Lin_q(q)
            c_new = (gat(zc[:, 0:H], zc[:, H:2 * H], att[0:1], att[1:2],
                         adj_cc, bia[0:1])
                     + gat(zq[:, 0:H], zc[:, 3 * H:4 * H], att[2:3], att[3:4],
                           adj_qc, bia[1:2])
                     + zc[:, 4 * H:5 * H] + bia[3:4])
            q_new = (gat(zc[:, 2 * H:3 * H], zq[:, H:2 * H], att[4:5], att[5:6],
                         adj_cq, bia[2:3])
                     + zq[:, 2 * H:3 * H] + bia[4:5])
            c = jnp.maximum(c_new, 0.0)
            q = jnp.maximum(q_new, 0.0)

        # padded tables (index-0 rows are zeros: merge_zeros / padding_idx=0):
        #   rows [0 : NQ+1]         = q_tab
        #   rows [QPAD : QPAD+NC+1] = c_tab   (QPAD sublane-aligned)
        tabs_ref[...] = jnp.concatenate(
            [jnp.zeros((1, D), jnp.float32), q,
             jnp.zeros((QPAD - NQ, D), jnp.float32), c], axis=0)

    return kernel


# -----------------------------------------------------------------------------
# Kernel 2: embedding gathers + GRU recurrence + (hoisted) predictor
# -----------------------------------------------------------------------------
def make_predict_kernel(*, B_pad, S, C, D, NC, NQ, QPAD):
    H2 = 2 * D
    SBp = S * B_pad

    def kernel(tabs_ref, seq_ref, gruw_ref, predw_ref, bias_ref, out_ref):
        q_tab = tabs_ref[0:NQ + 1, :]                      # [NQ+1, D]
        c_tab = tabs_ref[QPAD:QPAD + NC + 1, :]            # [NC+1, D]

        seq = seq_ref[...]                                 # [SBp, 2+C] int32
        q_idx = seq[:, 0:1]
        op = seq[:, 1:2].astype(jnp.float32)               # operate is binary 0/1
        conc = seq[:, 2:2 + C]

        # ---- in-kernel gathers via one-hot / count matmuls (f32, exact) ----
        iota_q = lax.broadcasted_iota(jnp.int32, (SBp, NQ + 1), 1)
        oh_q = (q_idx == iota_q).astype(jnp.float32)
        e_q = _mm(oh_q, q_tab, bf16=False)                 # [SBp, D]

        iota_c = lax.broadcasted_iota(jnp.int32, (SBp, NC + 1), 1)
        cnt = (conc[:, 0:1] == iota_c).astype(jnp.float32)
        for j in range(1, C):
            cnt = cnt + (conc[:, j:j + 1] == iota_c).astype(jnp.float32)
        cnt = cnt * (iota_c > 0).astype(jnp.float32)       # exclude padding idx 0
        filt_sum = jnp.sum(cnt, axis=-1, keepdims=True)
        div = jnp.where(filt_sum == 0.0, 1.0, filt_sum)
        e_c = _mm(cnt, c_tab, bf16=False) / div            # [SBp, D] masked mean

        # ---- packed weights -------------------------------------------------
        w_ih = gruw_ref[0:3 * H2, :]                       # [3H2, H2] bf16
        w_hh = gruw_ref[3 * H2:6 * H2, :]                  # [3H2, H2] bf16
        w1h = predw_ref[0:D, :]                            # [D, H2]   bf16
        w1qc = predw_ref[D:2 * D, :]                       # [D, H2]   bf16
        bias = bias_ref[...]                               # [8, 3H2]  f32
        b_ih, b_hh = bias[0:1, :], bias[1:2, :]
        b1, w2, b2 = bias[2:3, 0:D], bias[3:4, 0:D], bias[4:5, 0:1]

        # ---- hoisted time-parallel matmuls (off the serial recurrence) -----
        vqo = jnp.concatenate([e_c * op, e_c * (1.0 - op)], axis=-1)   # [SBp, H2]
        gi_all = _mm(vqo, w_ih, trans_b=True) + b_ih                   # [SBp, 3H2]
        pe_all = _mm(jnp.concatenate([e_q, e_c], axis=-1), w1qc,
                     trans_b=True) + b1                                # [SBp, D]
        b_hh_b = jnp.broadcast_to(b_hh, (B_pad, 3 * H2))               # hoisted bcast

        # ---- serial GRU (PyTorch gate order r, z, n): 1 MXU op / step ------
        h = jnp.zeros((B_pad, H2), jnp.float32)            # h_{-1} = merge_h = 0
        h_prev = []
        for t in range(S):                                 # fully unrolled (S=8)
            h_prev.append(h)                               # record h_{t-1}
            gi_t = gi_all[t * B_pad:(t + 1) * B_pad, :]    # tile-aligned slice
            gh = _mm(h, w_hh, trans_b=True) + b_hh_b       # [B_pad, 3H2]
            r = jax.nn.sigmoid(gi_t[:, 0:H2] + gh[:, 0:H2])
            z = jax.nn.sigmoid(gi_t[:, H2:2 * H2] + gh[:, H2:2 * H2])
            n = jnp.tanh(gi_t[:, 2 * H2:3 * H2] + r * gh[:, 2 * H2:3 * H2])
            h = (1.0 - z) * n + z * h

        # ---- hoisted predictor on stacked shifted hidden states ------------
        h_hist = jnp.concatenate(h_prev, axis=0)                       # [SBp, H2]
        hid = jnp.tanh(pe_all + _mm(h_hist, w1h, trans_b=True))        # [SBp, D]
        logit = _mm(w2, hid, trans_b=True, bf16=False) + b2            # [1, SBp]
        out_ref[...] = jax.nn.sigmoid(logit)                           # single store

    return kernel


# -----------------------------------------------------------------------------
# Host-side packing into a few HBM slabs (done once per model / graph)
# -----------------------------------------------------------------------------
def pack_encoder_inputs(params, graph, *, n_layer):
    c_x, q_x = graph["c_x"], graph["q_x"]
    NC, BERT = c_x.shape
    NQ = q_x.shape[0]
    D = params["pred"]["w1"].shape[0]
    CPAD = _rup(NC, 8)
    ABLK = _rup(max(NC, NQ), 8)

    xfeat = jnp.zeros((CPAD + NQ, BERT), jnp.float32)
    xfeat = xfeat.at[0:NC, :].set(c_x).at[CPAD:CPAD + NQ, :].set(q_x)

    adjs = jnp.zeros((3 * ABLK, ABLK), jnp.float32)
    adjs = adjs.at[0:NC, 0:NC].set(graph["adj_cc"])
    adjs = adjs.at[ABLK:ABLK + NC, 0:NQ].set(graph["adj_qc"])
    adjs = adjs.at[2 * ABLK:2 * ABLK + NQ, 0:NC].set(graph["adj_cq"])

    def pad_to(a, rows, cols):
        return jnp.pad(a, ((0, rows - a.shape[0]), (0, cols - a.shape[1])))

    blocks = []
    for l in range(n_layer):
        lp = params["gcn"][l]
        blocks += [pad_to(lp["Wc"], 5 * D, BERT), pad_to(lp["Wq"], 3 * D, BERT),
                   pad_to(lp["att"], 8, BERT), pad_to(lp["bias"], 8, BERT)]
    wenc = jnp.concatenate(blocks, axis=0).astype(jnp.float32)
    return xfeat, adjs, wenc


def pack_predictor_weights(params):
    D = params["pred"]["w1"].shape[0]
    H2 = 2 * D
    gru = params["gru"]
    gru_w = jnp.concatenate([gru["w_ih"], gru["w_hh"]], axis=0).astype(jnp.bfloat16)
    w1 = params["pred"]["w1"]                                   # [D, 4D]
    pred_w = jnp.concatenate([w1[:, :H2], w1[:, H2:]], axis=0).astype(jnp.bfloat16)
    biases = jnp.zeros((8, 3 * H2), jnp.float32)
    biases = biases.at[0:1, :].set(gru["b_ih"])
    biases = biases.at[1:2, :].set(gru["b_hh"])
    biases = biases.at[2:3, 0:D].set(params["pred"]["b1"])
    biases = biases.at[3:4, 0:D].set(params["pred"]["w2"])
    biases = biases.at[4:5, 0:1].set(params["pred"]["b2"])
    return gru_w, pred_w, biases


# -----------------------------------------------------------------------------
# pallas_call wrappers
# -----------------------------------------------------------------------------
@functools.partial(jax.jit, static_argnames=("n_layer", "nc", "nq", "d"))
def encode_graph(xfeat, adjs, wenc, *, n_layer, nc, nq, d):
    bert = xfeat.shape[1]
    cpad = xfeat.shape[0] - nq
    ablk = adjs.shape[1]
    qpad = _rup(nq + 1, 8)
    kernel = make_encoder_kernel(n_layer=n_layer, D=d, BERT=bert, NC=nc, NQ=nq,
                                 CPAD=cpad, QPAD=qpad, ABLK=ablk)
    return pl.pallas_call(
        kernel,
        out_shape=jax.ShapeDtypeStruct((qpad + nc + 1, d), jnp.float32),
        compiler_params=pltpu.CompilerParams(vmem_limit_bytes=32 * 1024 * 1024),
    )(xfeat, adjs, wenc)


@functools.partial(jax.jit, static_argnames=("nc", "nq"))
def sinkt_predict(tabs, gru_w, pred_w, biases, q_seq, concepts, operate, *, nc, nq):
    B, S = q_seq.shape
    C = concepts.shape[-1]
    D = pred_w.shape[0] // 2
    qpad = _rup(nq + 1, 8)
    b_pad = _rup(B, 8)                      # sublane-align per-step slices

    # pad batch + flatten time-major: row = t*b_pad + b (contiguous & aligned)
    qp = jnp.zeros((b_pad, S), jnp.int32).at[:B].set(q_seq.astype(jnp.int32))
    cp = jnp.zeros((b_pad, S, C), jnp.int32).at[:B].set(concepts.astype(jnp.int32))
    # operate is binary (0/1) in SINKT, so the int32 round-trip is exact.
    op = jnp.zeros((b_pad, S), jnp.int32).at[:B].set(operate.astype(jnp.int32))
    seqdat = jnp.concatenate(
        [qp.T.reshape(S * b_pad, 1), op.T.reshape(S * b_pad, 1),
         jnp.transpose(cp, (1, 0, 2)).reshape(S * b_pad, C)], axis=1)

    kernel = make_predict_kernel(B_pad=b_pad, S=S, C=C, D=D, NC=nc, NQ=nq,
                                 QPAD=qpad)
    out = pl.pallas_call(
        kernel,
        out_shape=jax.ShapeDtypeStruct((1, S * b_pad), jnp.float32),
        compiler_params=pltpu.CompilerParams(vmem_limit_bytes=32 * 1024 * 1024),
    )(tabs, seqdat, gru_w, pred_w, biases)
    return out.reshape(S, b_pad)[:, :B].T          # [B, S]


def sinkt_forward(params, graph, q_seq, concepts, operate, *, n_layer):
    """Full forward; in a serving loop `tabs` should be computed once & cached."""
    nc, nq = graph["c_x"].shape[0], graph["q_x"].shape[0]
    d = params["pred"]["w1"].shape[0]
    xfeat, adjs, wenc = pack_encoder_inputs(params, graph, n_layer=n_layer)
    gru_w, pred_w, biases = pack_predictor_weights(params)
    tabs = encode_graph(xfeat, adjs, wenc, n_layer=n_layer, nc=nc, nq=nq, d=d)
    return sinkt_predict(tabs, gru_w, pred_w, biases, q_seq, concepts, operate,
                         nc=nc, nq=nq)


# -----------------------------------------------------------------------------
# Deterministic parameter / graph / input construction
# -----------------------------------------------------------------------------
def _init(key, shape, scale=0.1):
    return scale * jax.random.normal(key, shape, dtype=jnp.float32)


def build_everything():
    D = 16            # args.dim (node_dim / hidden_dim)
    BERT = 32         # LM embedding size (q_emb_size == bert_emb_size)
    NC = 5            # concept_num
    NQ = 6            # problem_number
    NL = 2            # args.n_layer
    B, S, C = 2, 8, 3

    key = jax.random.PRNGKey(0)
    keys = iter(jax.random.split(key, 64))

    # --- graph (gen_graph): 1 = concept prereq concept, 2 = question<->concept
    N = NC + NQ
    edge = jnp.zeros((N, N), jnp.float32)
    for (i, j) in [(0, 1), (1, 2), (2, 3), (3, 4)]:
        edge = edge.at[i, j].set(1.0)
    for qid in range(NQ):
        for cc in (qid % NC, (qid + 2) % NC):
            edge = edge.at[NC + qid, cc].set(2.0)   # question 'contain' concept
            edge = edge.at[cc, NC + qid].set(2.0)   # concept 'compose' question
    # dense masks, layout [dst, src]
    adj_cc = (edge[:NC, :NC] == 1.0).astype(jnp.float32).T
    adj_qc = (edge[NC:, :NC] == 2.0).astype(jnp.float32).T    # [NC, NQ]
    adj_cq = (edge[:NC, NC:] == 2.0).astype(jnp.float32).T    # [NQ, NC]

    graph = {
        "c_x": _init(next(keys), (NC, BERT), 1.0),   # c_emb
        "q_x": _init(next(keys), (NQ, BERT), 1.0),   # q_emb
        "adj_cc": adj_cc, "adj_qc": adj_qc, "adj_cq": adj_cq,
    }

    # --- encoder params (stacked per-source-type weights per layer) ---------
    gcn = []
    for l in range(NL):
        f_in = BERT if l == 0 else D
        gcn.append({
            # rows: [w_src_cc; w_dst_cc; w_src_cq; w_dst_qc; w_lin_c]
            "Wc": _init(next(keys), (5 * D, f_in)),
            # rows: [w_src_qc; w_dst_cq; w_lin_q]
            "Wq": _init(next(keys), (3 * D, f_in)),
            # rows: [att_src_cc, att_dst_cc, att_src_qc, att_dst_qc, att_src_cq, att_dst_cq]
            "att": _init(next(keys), (6, D)),
            # rows: [b_gat_cc, b_gat_qc, b_gat_cq, b_lin_c, b_lin_q]
            "bias": jnp.concatenate(
                [jnp.zeros((3, D), jnp.float32), _init(next(keys), (2, D))], axis=0),
        })

    H2 = 2 * D
    params = {
        "gcn": gcn,
        "gru": {"w_ih": _init(next(keys), (3 * H2, H2)),
                "w_hh": _init(next(keys), (3 * H2, H2)),
                "b_ih": _init(next(keys), (1, 3 * H2)),
                "b_hh": _init(next(keys), (1, 3 * H2))},
        "pred": {"w1": _init(next(keys), (D, 4 * D)),
                 "b1": _init(next(keys), (1, D)),
                 "w2": _init(next(keys), (1, D)),
                 "b2": _init(next(keys), (1, 1))},
    }

    # --- forward inputs ------------------------------------------------------
    q_seq = jax.random.randint(next(keys), (B, S), 1, NQ + 1, dtype=jnp.int32)
    concepts = jax.random.randint(next(keys), (B, S, C), 0, NC + 1, dtype=jnp.int32)
    operate = jax.random.randint(next(keys), (B, S), 0, 2).astype(jnp.float32)

    return params, graph, (q_seq, concepts, operate), NL


if __name__ == "__main__":
    params, graph, (q_seq, concepts, operate), n_layer = build_everything()
    NC, NQ = graph["c_x"].shape[0], graph["q_x"].shape[0]
    D = params["pred"]["w1"].shape[0]

    # Pack once; the graph encoder runs once and its output (tabs) is the
    # cacheable node-table slab reused for every subsequent batch.
    xfeat, adjs, wenc = pack_encoder_inputs(params, graph, n_layer=n_layer)
    gru_w, pred_w, biases = pack_predictor_weights(params)
    tabs = encode_graph(xfeat, adjs, wenc, n_layer=n_layer, nc=NC, nq=NQ, d=D)

    prob = sinkt_predict(tabs, gru_w, pred_w, biases, q_seq, concepts, operate,
                         nc=NC, nq=NQ)
    prob = jax.block_until_ready(prob)

    assert prob.shape == (q_seq.shape[0], q_seq.shape[1])
    assert bool(jnp.all(jnp.isfinite(prob)))
    assert bool(jnp.all((prob >= 0.0) & (prob <= 1.0)))
    print("KERNEL_OK")
</pallas_src>

<mosaic_0001>
module attributes {stable_mosaic.version = 11 : i64} {
  func.func @kernel(%arg0: memref<14x32xf32, #tpu.memory_space<vmem>>, %arg1: memref<24x8xf32, #tpu.memory_space<vmem>>, %arg2: memref<288x32xf32, #tpu.memory_space<vmem>>, %arg3: memref<14x16xf32, #tpu.memory_space<vmem>>) attributes {dimension_semantics = [], scalar_prefetch = 0 : i64, scratch_operands = 0 : i64, tpu.core_type = #tpu.core_type<tc>} {
    %c0 = arith.constant 0 : index
    %c0_0 = arith.constant 0 : index
    %0 = vector.load %arg0[%c0, %c0_0] : memref<14x32xf32, #tpu.memory_space<vmem>>, vector<5x32xf32>
    %c8 = arith.constant 8 : index
    %c0_1 = arith.constant 0 : index
    %1 = vector.load %arg0[%c8, %c0_1] : memref<14x32xf32, #tpu.memory_space<vmem>>, vector<6x32xf32>
    %c0_2 = arith.constant 0 : index
    %c0_3 = arith.constant 0 : index
    %2 = vector.load %arg1[%c0_2, %c0_3] : memref<24x8xf32, #tpu.memory_space<vmem>>, vector<8x8xf32>
    %3 = vector.extract_strided_slice %2 {offsets = [0, 0], sizes = [5, 5], strides = [1, 1]} : vector<8x8xf32> to vector<5x5xf32>
    %c8_4 = arith.constant 8 : index
    %c0_5 = arith.constant 0 : index
    %4 = vector.load %arg1[%c8_4, %c0_5] : memref<24x8xf32, #tpu.memory_space<vmem>>, vector<8x8xf32>
    %5 = vector.extract_strided_slice %4 {offsets = [0, 0], sizes = [5, 6], strides = [1, 1]} : vector<8x8xf32> to vector<5x6xf32>
    %c16 = arith.constant 16 : index
    %c0_6 = arith.constant 0 : index
    %6 = vector.load %arg1[%c16, %c0_6] : memref<24x8xf32, #tpu.memory_space<vmem>>, vector<8x8xf32>
    %7 = vector.extract_strided_slice %6 {offsets = [0, 0], sizes = [6, 5], strides = [1, 1]} : vector<8x8xf32> to vector<6x5xf32>
    %c0_7 = arith.constant 0 : index
    %c0_8 = arith.constant 0 : index
    %8 = vector.load %arg2[%c0_7, %c0_8] : memref<288x32xf32, #tpu.memory_space<vmem>>, vector<80x32xf32>
    %c80 = arith.constant 80 : index
    %c0_9 = arith.constant 0 : index
    %9 = vector.load %arg2[%c80, %c0_9] : memref<288x32xf32, #tpu.memory_space<vmem>>, vector<48x32xf32>
    %c128 = arith.constant 128 : index
    %c0_10 = arith.constant 0 : index
    %10 = vector.load %arg2[%c128, %c0_10] : memref<288x32xf32, #tpu.memory_space<vmem>>, vector<8x16xf32>
    %c136 = arith.constant 136 : index
    %c0_11 = arith.constant 0 : index
    %11 = vector.load %arg2[%c136, %c0_11] : memref<288x32xf32, #tpu.memory_space<vmem>>, vector<8x16xf32>
    %12 = arith.truncf %0 : vector<5x32xf32> to vector<5x32xbf16>
    %13 = arith.truncf %8 : vector<80x32xf32> to vector<80x32xbf16>
    %cst = arith.constant dense<0.000000e+00> : vector<5x80xf32>
    %14 = tpu.matmul %12, %13, %cst {dimension_numbers = #tpu.dot_dimension_numbers<[1], [1], [0], [0], [0, 0, 1, 0], [], []>} : vector<5x32xbf16>, vector<80x32xbf16>, vector<5x80xf32> -> vector<5x80xf32>
    %15 = arith.truncf %1 : vector<6x32xf32> to vector<6x32xbf16>
    %16 = arith.truncf %9 : vector<48x32xf32> to vector<48x32xbf16>
    %cst_12 = arith.constant dense<0.000000e+00> : vector<6x48xf32>
    %17 = tpu.matmul %15, %16, %cst_12 {dimension_numbers = #tpu.dot_dimension_numbers<[1], [1], [0], [0], [0, 0, 1, 0], [], []>} : vector<6x32xbf16>, vector<48x32xbf16>, vector<6x48xf32> -> vector<6x48xf32>
    %18 = vector.extract_strided_slice %14 {offsets = [0, 0], sizes = [5, 16], strides = [1, 1]} : vector<5x80xf32> to vector<5x16xf32>
    %19 = vector.extract_strided_slice %14 {offsets = [0, 16], sizes = [5, 16], strides = [1, 1]} : vector<5x80xf32> to vector<5x16xf32>
    %20 = vector.extract_strided_slice %10 {offsets = [0, 0], sizes = [1, 16], strides = [1, 1]} : vector<8x16xf32> to vector<1x16xf32>
    %21 = vector.extract_strided_slice %10 {offsets = [1, 0], sizes = [1, 16], strides = [1, 1]} : vector<8x16xf32> to vector<1x16xf32>
    %22 = vector.extract_strided_slice %11 {offsets = [0, 0], sizes = [1, 16], strides = [1, 1]} : vector<8x16xf32> to vector<1x16xf32>
    %23 = arith.truncf %20 : vector<1x16xf32> to vector<1x16xbf16>
    %24 = arith.truncf %18 : vector<5x16xf32> to vector<5x16xbf16>
    %cst_13 = arith.constant dense<0.000000e+00> : vector<1x5xf32>
    %25 = tpu.matmul %23, %24, %cst_13 {dimension_numbers = #tpu.dot_dimension_numbers<[1], [1], [0], [0], [0, 0, 1, 0], [], []>} : vector<1x16xbf16>, vector<5x16xbf16>, vector<1x5xf32> -> vector<1x5xf32>
    %26 = vector.broadcast %21 : vector<1x16xf32> to vector<5x16xf32>
    %27 = arith.mulf %19, %26 : vector<5x16xf32>
    %cst_14 = arith.constant dense<0.000000e+00> : vector<5xf32>
    %28 = vector.multi_reduction <add>, %27, %cst_14 [1] : vector<5x16xf32> to vector<5xf32>
    %29 = vector.shape_cast %28 : vector<5xf32> to vector<5x1xf32>
    %30 = vector.broadcast %29 : vector<5x1xf32> to vector<5x5xf32>
    %31 = vector.broadcast %25 : vector<1x5xf32> to vector<5x5xf32>
    %32 = arith.addf %30, %31 : vector<5x5xf32>
    %cst_15 = arith.constant 0.000000e+00 : f32
    %33 = vector.broadcast %cst_15 : f32 to vector<5x5xf32>
    %34 = arith.cmpf ogt, %32, %33 : vector<5x5xf32>
    %cst_16 = arith.constant 2.000000e-01 : f32
    %35 = vector.broadcast %cst_16 : f32 to vector<5x5xf32>
    %36 = arith.mulf %35, %32 : vector<5x5xf32>
    %37 = arith.select %34, %32, %36 : vector<5x5xi1>, vector<5x5xf32>
    %cst_17 = arith.constant 0.000000e+00 : f32
    %38 = vector.broadcast %cst_17 : f32 to vector<5x5xf32>
    %39 = arith.cmpf ogt, %3, %38 : vector<5x5xf32>
    %cst_18 = arith.constant -1.000000e+30 : f32
    %40 = vector.broadcast %cst_18 : f32 to vector<5x5xf32>
    %41 = arith.select %39, %37, %40 : vector<5x5xi1>, vector<5x5xf32>
    %cst_19 = arith.constant dense<0xFF800000> : vector<5xf32>
    %42 = vector.multi_reduction <maximumf>, %41, %cst_19 [1] : vector<5x5xf32> to vector<5xf32>
    %43 = vector.shape_cast %42 : vector<5xf32> to vector<5x1xf32>
    %44 = vector.broadcast %43 : vector<5x1xf32> to vector<5x5xf32>
    %45 = arith.subf %41, %44 : vector<5x5xf32>
    %46 = math.exp %45 : vector<5x5xf32>
    %47 = arith.mulf %46, %3 : vector<5x5xf32>
    %cst_20 = arith.constant dense<0.000000e+00> : vector<5xf32>
    %48 = vector.multi_reduction <add>, %47, %cst_20 [1] : vector<5x5xf32> to vector<5xf32>
    %49 = vector.shape_cast %48 : vector<5xf32> to vector<5x1xf32>
    %cst_21 = arith.constant 0.000000e+00 : f32
    %50 = vector.broadcast %cst_21 : f32 to vector<5x1xf32>
    %51 = arith.cmpf oeq, %49, %50 : vector<5x1xf32>
    %cst_22 = arith.constant 1.000000e+00 : f32
    %52 = vector.broadcast %cst_22 : f32 to vector<5x1xf32>
    %53 = arith.select %51, %52, %49 : vector<5x1xi1>, vector<5x1xf32>
    %54 = vector.broadcast %53 : vector<5x1xf32> to vector<5x5xf32>
    %55 = arith.divf %47, %54 : vector<5x5xf32>
    %56 = arith.truncf %55 : vector<5x5xf32> to vector<5x5xbf16>
    %57 = arith.truncf %18 : vector<5x16xf32> to vector<5x16xbf16>
    %cst_23 = arith.constant dense<0.000000e+00> : vector<5x16xf32>
    %58 = tpu.matmul %56, %57, %cst_23 {dimension_numbers = #tpu.dot_dimension_numbers<[1], [0], [0], [1], [0, 0, 1, 1], [], []>} : vector<5x5xbf16>, vector<5x16xbf16>, vector<5x16xf32> -> vector<5x16xf32>
    %59 = vector.broadcast %22 : vector<1x16xf32> to vector<5x16xf32>
    %60 = arith.addf %58, %59 : vector<5x16xf32>
    %61 = vector.extract_strided_slice %17 {offsets = [0, 0], sizes = [6, 16], strides = [1, 1]} : vector<6x48xf32> to vector<6x16xf32>
    %62 = vector.extract_strided_slice %14 {offsets = [0, 48], sizes = [5, 16], strides = [1, 1]} : vector<5x80xf32> to vector<5x16xf32>
    %63 = vector.extract_strided_slice %10 {offsets = [2, 0], sizes = [1, 16], strides = [1, 1]} : vector<8x16xf32> to vector<1x16xf32>
    %64 = vector.extract_strided_slice %10 {offsets = [3, 0], sizes = [1, 16], strides = [1, 1]} : vector<8x16xf32> to vector<1x16xf32>
    %65 = vector.extract_strided_slice %11 {offsets = [1, 0], sizes = [1, 16], strides = [1, 1]} : vector<8x16xf32> to vector<1x16xf32>
    %66 = arith.truncf %63 : vector<1x16xf32> to vector<1x16xbf16>
    %67 = arith.truncf %61 : vector<6x16xf32> to vector<6x16xbf16>
    %cst_24 = arith.constant dense<0.000000e+00> : vector<1x6xf32>
    %68 = tpu.matmul %66, %67, %cst_24 {dimension_numbers = #tpu.dot_dimension_numbers<[1], [1], [0], [0], [0, 0, 1, 0], [], []>} : vector<1x16xbf16>, vector<6x16xbf16>, vector<1x6xf32> -> vector<1x6xf32>
    %69 = vector.broadcast %64 : vector<1x16xf32> to vector<5x16xf32>
    %70 = arith.mulf %62, %69 : vector<5x16xf32>
    %cst_25 = arith.constant dense<0.000000e+00> : vector<5xf32>
    %71 = vector.multi_reduction <add>, %70, %cst_25 [1] : vector<5x16xf32> to vector<5xf32>
    %72 = vector.shape_cast %71 : vector<5xf32> to vector<5x1xf32>
    %73 = vector.broadcast %72 : vector<5x1xf32> to vector<5x6xf32>
    %74 = vector.broadcast %68 : vector<1x6xf32> to vector<5x6xf32>
    %75 = arith.addf %73, %74 : vector<5x6xf32>
    %cst_26 = arith.constant 0.000000e+00 : f32
    %76 = vector.broadcast %cst_26 : f32 to vector<5x6xf32>
    %77 = arith.cmpf ogt, %75, %76 : vector<5x6xf32>
    %cst_27 = arith.constant 2.000000e-01 : f32
    %78 = vector.broadcast %cst_27 : f32 to vector<5x6xf32>
    %79 = arith.mulf %78, %75 : vector<5x6xf32>
    %80 = arith.select %77, %75, %79 : vector<5x6xi1>, vector<5x6xf32>
    %cst_28 = arith.constant 0.000000e+00 : f32
    %81 = vector.broadcast %cst_28 : f32 to vector<5x6xf32>
    %82 = arith.cmpf ogt, %5, %81 : vector<5x6xf32>
    %cst_29 = arith.constant -1.000000e+30 : f32
    %83 = vector.broadcast %cst_29 : f32 to vector<5x6xf32>
    %84 = arith.select %82, %80, %83 : vector<5x6xi1>, vector<5x6xf32>
    %cst_30 = arith.constant dense<0xFF800000> : vector<5xf32>
    %85 = vector.multi_reduction <maximumf>, %84, %cst_30 [1] : vector<5x6xf32> to vector<5xf32>
    %86 = vector.shape_cast %85 : vector<5xf32> to vector<5x1xf32>
    %87 = vector.broadcast %86 : vector<5x1xf32> to vector<5x6xf32>
    %88 = arith.subf %84, %87 : vector<5x6xf32>
    %89 = math.exp %88 : vector<5x6xf32>
    %90 = arith.mulf %89, %5 : vector<5x6xf32>
    %cst_31 = arith.constant dense<0.000000e+00> : vector<5xf32>
    %91 = vector.multi_reduction <add>, %90, %cst_31 [1] : vector<5x6xf32> to vector<5xf32>
    %92 = vector.shape_cast %91 : vector<5xf32> to vector<5x1xf32>
    %cst_32 = arith.constant 0.000000e+00 : f32
    %93 = vector.broadcast %cst_32 : f32 to vector<5x1xf32>
    %94 = arith.cmpf oeq, %92, %93 : vector<5x1xf32>
    %cst_33 = arith.constant 1.000000e+00 : f32
    %95 = vector.broadcast %cst_33 : f32 to vector<5x1xf32>
    %96 = arith.select %94, %95, %92 : vector<5x1xi1>, vector<5x1xf32>
    %97 = vector.broadcast %96 : vector<5x1xf32> to vector<5x6xf32>
    %98 = arith.divf %90, %97 : vector<5x6xf32>
    %99 = arith.truncf %98 : vector<5x6xf32> to vector<5x6xbf16>
    %100 = arith.truncf %61 : vector<6x16xf32> to vector<6x16xbf16>
    %cst_34 = arith.constant dense<0.000000e+00> : vector<5x16xf32>
    %101 = tpu.matmul %99, %100, %cst_34 {dimension_numbers = #tpu.dot_dimension_numbers<[1], [0], [0], [1], [0, 0, 1, 1], [], []>} : vector<5x6xbf16>, vector<6x16xbf16>, vector<5x16xf32> -> vector<5x16xf32>
    %102 = vector.broadcast %65 : vector<1x16xf32> to vector<5x16xf32>
    %103 = arith.addf %101, %102 : vector<5x16xf32>
    %104 = arith.addf %60, %103 : vector<5x16xf32>
    %105 = vector.extract_strided_slice %14 {offsets = [0, 64], sizes = [5, 16], strides = [1, 1]} : vector<5x80xf32> to vector<5x16xf32>
    %106 = arith.addf %104, %105 : vector<5x16xf32>
    %107 = vector.extract_strided_slice %11 {offsets = [3, 0], sizes = [1, 16], strides = [1, 1]} : vector<8x16xf32> to vector<1x16xf32>
    %108 = vector.broadcast %107 : vector<1x16xf32> to vector<5x16xf32>
    %109 = arith.addf %106, %108 : vector<5x16xf32>
    %110 = vector.extract_strided_slice %14 {offsets = [0, 32], sizes = [5, 16], strides = [1, 1]} : vector<5x80xf32> to vector<5x16xf32>
    %111 = vector.extract_strided_slice %17 {offsets = [0, 16], sizes = [6, 16], strides = [1, 1]} : vector<6x48xf32> to vector<6x16xf32>
    %112 = vector.extract_strided_slice %10 {offsets = [4, 0], sizes = [1, 16], strides = [1, 1]} : vector<8x16xf32> to vector<1x16xf32>
    %113 = vector.extract_strided_slice %10 {offsets = [5, 0], sizes = [1, 16], strides = [1, 1]} : vector<8x16xf32> to vector<1x16xf32>
    %114 = vector.extract_strided_slice %11 {offsets = [2, 0], sizes = [1, 16], strides = [1, 1]} : vector<8x16xf32> to vector<1x16xf32>
    %115 = arith.truncf %112 : vector<1x16xf32> to vector<1x16xbf16>
    %116 = arith.truncf %110 : vector<5x16xf32> to vector<5x16xbf16>
    %cst_35 = arith.constant dense<0.000000e+00> : vector<1x5xf32>
    %117 = tpu.matmul %115, %116, %cst_35 {dimension_numbers = #tpu.dot_dimension_numbers<[1], [1], [0], [0], [0, 0, 1, 0], [], []>} : vector<1x16xbf16>, vector<5x16xbf16>, vector<1x5xf32> -> vector<1x5xf32>
    %118 = vector.broadcast %113 : vector<1x16xf32> to vector<6x16xf32>
    %119 = arith.mulf %111, %118 : vector<6x16xf32>
    %cst_36 = arith.constant dense<0.000000e+00> : vector<6xf32>
    %120 = vector.multi_reduction <add>, %119, %cst_36 [1] : vector<6x16xf32> to vector<6xf32>
    %121 = vector.shape_cast %120 : vector<6xf32> to vector<6x1xf32>
    %122 = vector.broadcast %121 : vector<6x1xf32> to vector<6x5xf32>
    %123 = vector.broadcast %117 : vector<1x5xf32> to vector<6x5xf32>
    %124 = arith.addf %122, %123 : vector<6x5xf32>
    %cst_37 = arith.constant 0.000000e+00 : f32
    %125 = vector.broadcast %cst_37 : f32 to vector<6x5xf32>
    %126 = arith.cmpf ogt, %124, %125 : vector<6x5xf32>
    %cst_38 = arith.constant 2.000000e-01 : f32
    %127 = vector.broadcast %cst_38 : f32 to vector<6x5xf32>
    %128 = arith.mulf %127, %124 : vector<6x5xf32>
    %129 = arith.select %126, %124, %128 : vector<6x5xi1>, vector<6x5xf32>
    %cst_39 = arith.constant 0.000000e+00 : f32
    %130 = vector.broadcast %cst_39 : f32 to vector<6x5xf32>
    %131 = arith.cmpf ogt, %7, %130 : vector<6x5xf32>
    %cst_40 = arith.constant -1.000000e+30 : f32
    %132 = vector.broadcast %cst_40 : f32 to vector<6x5xf32>
    %133 = arith.select %131, %129, %132 : vector<6x5xi1>, vector<6x5xf32>
    %cst_41 = arith.constant dense<0xFF800000> : vector<6xf32>
    %134 = vector.multi_reduction <maximumf>, %133, %cst_41 [1] : vector<6x5xf32> to vector<6xf32>
    %135 = vector.shape_cast %134 : vector<6xf32> to vector<6x1xf32>
    %136 = vector.broadcast %135 : vector<6x1xf32> to vector<6x5xf32>
    %137 = arith.subf %133, %136 : vector<6x5xf32>
    %138 = math.exp %137 : vector<6x5xf32>
    %139 = arith.mulf %138, %7 : vector<6x5xf32>
    %cst_42 = arith.constant dense<0.000000e+00> : vector<6xf32>
    %140 = vector.multi_reduction <add>, %139, %cst_42 [1] : vector<6x5xf32> to vector<6xf32>
    %141 = vector.shape_cast %140 : vector<6xf32> to vector<6x1xf32>
    %cst_43 = arith.constant 0.000000e+00 : f32
    %142 = vector.broadcast %cst_43 : f32 to vector<6x1xf32>
    %143 = arith.cmpf oeq, %141, %142 : vector<6x1xf32>
    %cst_44 = arith.constant 1.000000e+00 : f32
    %144 = vector.broadcast %cst_44 : f32 to vector<6x1xf32>
    %145 = arith.select %143, %144, %141 : vector<6x1xi1>, vector<6x1xf32>
    %146 = vector.broadcast %145 : vector<6x1xf32> to vector<6x5xf32>
    %147 = arith.divf %139, %146 : vector<6x5xf32>
    %148 = arith.truncf %147 : vector<6x5xf32> to vector<6x5xbf16>
    %149 = arith.truncf %110 : vector<5x16xf32> to vector<5x16xbf16>
    %cst_45 = arith.constant dense<0.000000e+00> : vector<6x16xf32>
    %150 = tpu.matmul %148, %149, %cst_45 {dimension_numbers = #tpu.dot_dimension_numbers<[1], [0], [0], [1], [0, 0, 1, 1], [], []>} : vector<6x5xbf16>, vector<5x16xbf16>, vector<6x16xf32> -> vector<6x16xf32>
    %151 = vector.broadcast %114 : vector<1x16xf32> to vector<6x16xf32>
    %152 = arith.addf %150, %151 : vector<6x16xf32>
    %153 = vector.extract_strided_slice %17 {offsets = [0, 32], sizes = [6, 16], strides = [1, 1]} : vector<6x48xf32> to vector<6x16xf32>
    %154 = arith.addf %152, %153 : vector<6x16xf32>
    %155 = vector.extract_strided_slice %11 {offsets = [4, 0], sizes = [1, 16], strides = [1, 1]} : vector<8x16xf32> to vector<1x16xf32>
    %156 = vector.broadcast %155 : vector<1x16xf32> to vector<6x16xf32>
    %157 = arith.addf %154, %156 : vector<6x16xf32>
    %cst_46 = arith.constant 0.000000e+00 : f32
    %158 = vector.broadcast %cst_46 : f32 to vector<5x16xf32>
    %159 = arith.maximumf %109, %158 : vector<5x16xf32>
    %cst_47 = arith.constant 0.000000e+00 : f32
    %160 = vector.broadcast %cst_47 : f32 to vector<6x16xf32>
    %161 = arith.maximumf %157, %160 : vector<6x16xf32>
    %c144 = arith.constant 144 : index
    %c0_48 = arith.constant 0 : index
    %162 = vector.load %arg2[%c144, %c0_48] : memref<288x32xf32, #tpu.memory_space<vmem>>, vector<80x16xf32>
    %c224 = arith.constant 224 : index
    %c0_49 = arith.constant 0 : index
    %163 = vector.load %arg2[%c224, %c0_49] : memref<288x32xf32, #tpu.memory_space<vmem>>, vector<48x16xf32>
    %c272 = arith.constant 272 : index
    %c0_50 = arith.constant 0 : index
    %164 = vector.load %arg2[%c272, %c0_50] : memref<288x32xf32, #tpu.memory_space<vmem>>, vector<8x16xf32>
    %c280 = arith.constant 280 : index
    %c0_51 = arith.constant 0 : index
    %165 = vector.load %arg2[%c280, %c0_51] : memref<288x32xf32, #tpu.memory_space<vmem>>, vector<8x16xf32>
    %166 = arith.truncf %159 : vector<5x16xf32> to vector<5x16xbf16>
    %167 = arith.truncf %162 : vector<80x16xf32> to vector<80x16xbf16>
    %cst_52 = arith.constant dense<0.000000e+00> : vector<5x80xf32>
    %168 = tpu.matmul %166, %167, %cst_52 {dimension_numbers = #tpu.dot_dimension_numbers<[1], [1], [0], [0], [0, 0, 1, 0], [], []>} : vector<5x16xbf16>, vector<80x16xbf16>, vector<5x80xf32> -> vector<5x80xf32>
    %169 = arith.truncf %161 : vector<6x16xf32> to vector<6x16xbf16>
    %170 = arith.truncf %163 : vector<48x16xf32> to vector<48x16xbf16>
    %cst_53 = arith.constant dense<0.000000e+00> : vector<6x48xf32>
    %171 = tpu.matmul %169, %170, %cst_53 {dimension_numbers = #tpu.dot_dimension_numbers<[1], [1], [0], [0], [0, 0, 1, 0], [], []>} : vector<6x16xbf16>, vector<48x16xbf16>, vector<6x48xf32> -> vector<6x48xf32>
    %172 = vector.extract_strided_slice %168 {offsets = [0, 0], sizes = [5, 16], strides = [1, 1]} : vector<5x80xf32> to vector<5x16xf32>
    %173 = vector.extract_strided_slice %168 {offsets = [0, 16], sizes = [5, 16], strides = [1, 1]} : vector<5x80xf32> to vector<5x16xf32>
    %174 = vector.extract_strided_slice %164 {offsets = [0, 0], sizes = [1, 16], strides = [1, 1]} : vector<8x16xf32> to vector<1x16xf32>
    %175 = vector.extract_strided_slice %164 {offsets = [1, 0], sizes = [1, 16], strides = [1, 1]} : vector<8x16xf32> to vector<1x16xf32>
    %176 = vector.extract_strided_slice %165 {offsets = [0, 0], sizes = [1, 16], strides = [1, 1]} : vector<8x16xf32> to vector<1x16xf32>
    %177 = arith.truncf %174 : vector<1x16xf32> to vector<1x16xbf16>
    %178 = arith.truncf %172 : vector<5x16xf32> to vector<5x16xbf16>
    %cst_54 = arith.constant dense<0.000000e+00> : vector<1x5xf32>
    %179 = tpu.matmul %177, %178, %cst_54 {dimension_numbers = #tpu.dot_dimension_numbers<[1], [1], [0], [0], [0, 0, 1, 0], [], []>} : vector<1x16xbf16>, vector<5x16xbf16>, vector<1x5xf32> -> vector<1x5xf32>
    %180 = vector.broadcast %175 : vector<1x16xf32> to vector<5x16xf32>
    %181 = arith.mulf %173, %180 : vector<5x16xf32>
    %cst_55 = arith.constant dense<0.000000e+00> : vector<5xf32>
    %182 = vector.multi_reduction <add>, %181, %cst_55 [1] : vector<5x16xf32> to vector<5xf32>
    %183 = vector.shape_cast %182 : vector<5xf32> to vector<5x1xf32>
    %184 = vector.broadcast %183 : vector<5x1xf32> to vector<5x5xf32>
    %185 = vector.broadcast %179 : vector<1x5xf32> to vector<5x5xf32>
    %186 = arith.addf %184, %185 : vector<5x5xf32>
    %cst_56 = arith.constant 0.000000e+00 : f32
    %187 = vector.broadcast %cst_56 : f32 to vector<5x5xf32>
    %188 = arith.cmpf ogt, %186, %187 : vector<5x5xf32>
    %cst_57 = arith.constant 2.000000e-01 : f32
    %189 = vector.broadcast %cst_57 : f32 to vector<5x5xf32>
    %190 = arith.mulf %189, %186 : vector<5x5xf32>
    %191 = arith.select %188, %186, %190 : vector<5x5xi1>, vector<5x5xf32>
    %cst_58 = arith.constant 0.000000e+00 : f32
    %192 = vector.broadcast %cst_58 : f32 to vector<5x5xf32>
    %193 = arith.cmpf ogt, %3, %192 : vector<5x5xf32>
    %cst_59 = arith.constant -1.000000e+30 : f32
    %194 = vector.broadcast %cst_59 : f32 to vector<5x5xf32>
    %195 = arith.select %193, %191, %194 : vector<5x5xi1>, vector<5x5xf32>
    %cst_60 = arith.constant dense<0xFF800000> : vector<5xf32>
    %196 = vector.multi_reduction <maximumf>, %195, %cst_60 [1] : vector<5x5xf32> to vector<5xf32>
    %197 = vector.shape_cast %196 : vector<5xf32> to vector<5x1xf32>
    %198 = vector.broadcast %197 : vector<5x1xf32> to vector<5x5xf32>
    %199 = arith.subf %195, %198 : vector<5x5xf32>
    %200 = math.exp %199 : vector<5x5xf32>
    %201 = arith.mulf %200, %3 : vector<5x5xf32>
    %cst_61 = arith.constant dense<0.000000e+00> : vector<5xf32>
    %202 = vector.multi_reduction <add>, %201, %cst_61 [1] : vector<5x5xf32> to vector<5xf32>
    %203 = vector.shape_cast %202 : vector<5xf32> to vector<5x1xf32>
    %cst_62 = arith.constant 0.000000e+00 : f32
    %204 = vector.broadcast %cst_62 : f32 to vector<5x1xf32>
    %205 = arith.cmpf oeq, %203, %204 : vector<5x1xf32>
    %cst_63 = arith.constant 1.000000e+00 : f32
    %206 = vector.broadcast %cst_63 : f32 to vector<5x1xf32>
    %207 = arith.select %205, %206, %203 : vector<5x1xi1>, vector<5x1xf32>
    %208 = vector.broadcast %207 : vector<5x1xf32> to vector<5x5xf32>
    %209 = arith.divf %201, %208 : vector<5x5xf32>
    %210 = arith.truncf %209 : vector<5x5xf32> to vector<5x5xbf16>
    %211 = arith.truncf %172 : vector<5x16xf32> to vector<5x16xbf16>
    %cst_64 = arith.constant dense<0.000000e+00> : vector<5x16xf32>
    %212 = tpu.matmul %210, %211, %cst_64 {dimension_numbers = #tpu.dot_dimension_numbers<[1], [0], [0], [1], [0, 0, 1, 1], [], []>} : vector<5x5xbf16>, vector<5x16xbf16>, vector<5x16xf32> -> vector<5x16xf32>
    %213 = vector.broadcast %176 : vector<1x16xf32> to vector<5x16xf32>
    %214 = arith.addf %212, %213 : vector<5x16xf32>
    %215 = vector.extract_strided_slice %171 {offsets = [0, 0], sizes = [6, 16], strides = [1, 1]} : vector<6x48xf32> to vector<6x16xf32>
    %216 = vector.extract_strided_slice %168 {offsets = [0, 48], sizes = [5, 16], strides = [1, 1]} : vector<5x80xf32> to vector<5x16xf32>
    %217 = vector.extract_strided_slice %164 {offsets = [2, 0], sizes = [1, 16], strides = [1, 1]} : vector<8x16xf32> to vector<1x16xf32>
    %218 = vector.extract_strided_slice %164 {offsets = [3, 0], sizes = [1, 16], strides = [1, 1]} : vector<8x16xf32> to vector<1x16xf32>
    %219 = vector.extract_strided_slice %165 {offsets = [1, 0], sizes = [1, 16], strides = [1, 1]} : vector<8x16xf32> to vector<1x16xf32>
    %220 = arith.truncf %217 : vector<1x16xf32> to vector<1x16xbf16>
    %221 = arith.truncf %215 : vector<6x16xf32> to vector<6x16xbf16>
    %cst_65 = arith.constant dense<0.000000e+00> : vector<1x6xf32>
    %222 = tpu.matmul %220, %221, %cst_65 {dimension_numbers = #tpu.dot_dimension_numbers<[1], [1], [0], [0], [0, 0, 1, 0], [], []>} : vector<1x16xbf16>, vector<6x16xbf16>, vector<1x6xf32> -> vector<1x6xf32>
    %223 = vector.broadcast %218 : vector<1x16xf32> to vector<5x16xf32>
    %224 = arith.mulf %216, %223 : vector<5x16xf32>
    %cst_66 = arith.constant dense<0.000000e+00> : vector<5xf32>
    %225 = vector.multi_reduction <add>, %224, %cst_66 [1] : vector<5x16xf32> to vector<5xf32>
    %226 = vector.shape_cast %225 : vector<5xf32> to vector<5x1xf32>
    %227 = vector.broadcast %226 : vector<5x1xf32> to vector<5x6xf32>
    %228 = vector.broadcast %222 : vector<1x6xf32> to vector<5x6xf32>
    %229 = arith.addf %227, %228 : vector<5x6xf32>
    %cst_67 = arith.constant 0.000000e+00 : f32
    %230 = vector.broadcast %cst_67 : f32 to vector<5x6xf32>
    %231 = arith.cmpf ogt, %229, %230 : vector<5x6xf32>
    %cst_68 = arith.constant 2.000000e-01 : f32
    %232 = vector.broadcast %cst_68 : f32 to vector<5x6xf32>
    %233 = arith.mulf %232, %229 : vector<5x6xf32>
    %234 = arith.select %231, %229, %233 : vector<5x6xi1>, vector<5x6xf32>
    %cst_69 = arith.constant 0.000000e+00 : f32
    %235 = vector.broadcast %cst_69 : f32 to vector<5x6xf32>
    %236 = arith.cmpf ogt, %5, %235 : vector<5x6xf32>
    %cst_70 = arith.constant -1.000000e+30 : f32
    %237 = vector.broadcast %cst_70 : f32 to vector<5x6xf32>
    %238 = arith.select %236, %234, %237 : vector<5x6xi1>, vector<5x6xf32>
    %cst_71 = arith.constant dense<0xFF800000> : vector<5xf32>
    %239 = vector.multi_reduction <maximumf>, %238, %cst_71 [1] : vector<5x6xf32> to vector<5xf32>
    %240 = vector.shape_cast %239 : vector<5xf32> to vector<5x1xf32>
    %241 = vector.broadcast %240 : vector<5x1xf32> to vector<5x6xf32>
    %242 = arith.subf %238, %241 : vector<5x6xf32>
    %243 = math.exp %242 : vector<5x6xf32>
    %244 = arith.mulf %243, %5 : vector<5x6xf32>
    %cst_72 = arith.constant dense<0.000000e+00> : vector<5xf32>
    %245 = vector.multi_reduction <add>, %244, %cst_72 [1] : vector<5x6xf32> to vector<5xf32>
    %246 = vector.shape_cast %245 : vector<5xf32> to vector<5x1xf32>
    %cst_73 = arith.constant 0.000000e+00 : f32
    %247 = vector.broadcast %cst_73 : f32 to vector<5x1xf32>
    %248 = arith.cmpf oeq, %246, %247 : vector<5x1xf32>
    %cst_74 = arith.constant 1.000000e+00 : f32
    %249 = vector.broadcast %cst_74 : f32 to vector<5x1xf32>
    %250 = arith.select %248, %249, %246 : vector<5x1xi1>, vector<5x1xf32>
    %251 = vector.broadcast %250 : vector<5x1xf32> to vector<5x6xf32>
    %252 = arith.divf %244, %251 : vector<5x6xf32>
    %253 = arith.truncf %252 : vector<5x6xf32> to vector<5x6xbf16>
    %254 = arith.truncf %215 : vector<6x16xf32> to vector<6x16xbf16>
    %cst_75 = arith.constant dense<0.000000e+00> : vector<5x16xf32>
    %255 = tpu.matmul %253, %254, %cst_75 {dimension_numbers = #tpu.dot_dimension_numbers<[1], [0], [0], [1], [0, 0, 1, 1], [], []>} : vector<5x6xbf16>, vector<6x16xbf16>, vector<5x16xf32> -> vector<5x16xf32>
    %256 = vector.broadcast %219 : vector<1x16xf32> to vector<5x16xf32>
    %257 = arith.addf %255, %256 : vector<5x16xf32>
    %258 = arith.addf %214, %257 : vector<5x16xf32>
    %259 = vector.extract_strided_slice %168 {offsets = [0, 64], sizes = [5, 16], strides = [1, 1]} : vector<5x80xf32> to vector<5x16xf32>
    %260 = arith.addf %258, %259 : vector<5x16xf32>
    %261 = vector.extract_strided_slice %165 {offsets = [3, 0], sizes = [1, 16], strides = [1, 1]} : vector<8x16xf32> to vector<1x16xf32>
    %262 = vector.broadcast %261 : vector<1x16xf32> to vector<5x16xf32>
    %263 = arith.addf %260, %262 : vector<5x16xf32>
    %264 = vector.extract_strided_slice %168 {offsets = [0, 32], sizes = [5, 16], strides = [1, 1]} : vector<5x80xf32> to vector<5x16xf32>
    %265 = vector.extract_strided_slice %171 {offsets = [0, 16], sizes = [6, 16], strides = [1, 1]} : vector<6x48xf32> to vector<6x16xf32>
    %266 = vector.extract_strided_slice %164 {offsets = [4, 0], sizes = [1, 16], strides = [1, 1]} : vector<8x16xf32> to vector<1x16xf32>
    %267 = vector.extract_strided_slice %164 {offsets = [5, 0], sizes = [1, 16], strides = [1, 1]} : vector<8x16xf32> to vector<1x16xf32>
    %268 = vector.extract_strided_slice %165 {offsets = [2, 0], sizes = [1, 16], strides = [1, 1]} : vector<8x16xf32> to vector<1x16xf32>
    %269 = arith.truncf %266 : vector<1x16xf32> to vector<1x16xbf16>
    %270 = arith.truncf %264 : vector<5x16xf32> to vector<5x16xbf16>
    %cst_76 = arith.constant dense<0.000000e+00> : vector<1x5xf32>
    %271 = tpu.matmul %269, %270, %cst_76 {dimension_numbers = #tpu.dot_dimension_numbers<[1], [1], [0], [0], [0, 0, 1, 0], [], []>} : vector<1x16xbf16>, vector<5x16xbf16>, vector<1x5xf32> -> vector<1x5xf32>
    %272 = vector.broadcast %267 : vector<1x16xf32> to vector<6x16xf32>
    %273 = arith.mulf %265, %272 : vector<6x16xf32>
    %cst_77 = arith.constant dense<0.000000e+00> : vector<6xf32>
    %274 = vector.multi_reduction <add>, %273, %cst_77 [1] : vector<6x16xf32> to vector<6xf32>
    %275 = vector.shape_cast %274 : vector<6xf32> to vector<6x1xf32>
    %276 = vector.broadcast %275 : vector<6x1xf32> to vector<6x5xf32>
    %277 = vector.broadcast %271 : vector<1x5xf32> to vector<6x5xf32>
    %278 = arith.addf %276, %277 : vector<6x5xf32>
    %cst_78 = arith.constant 0.000000e+00 : f32
    %279 = vector.broadcast %cst_78 : f32 to vector<6x5xf32>
    %280 = arith.cmpf ogt, %278, %279 : vector<6x5xf32>
    %cst_79 = arith.constant 2.000000e-01 : f32
    %281 = vector.broadcast %cst_79 : f32 to vector<6x5xf32>
    %282 = arith.mulf %281, %278 : vector<6x5xf32>
    %283 = arith.select %280, %278, %282 : vector<6x5xi1>, vector<6x5xf32>
    %cst_80 = arith.constant 0.000000e+00 : f32
    %284 = vector.broadcast %cst_80 : f32 to vector<6x5xf32>
    %285 = arith.cmpf ogt, %7, %284 : vector<6x5xf32>
    %cst_81 = arith.constant -1.000000e+30 : f32
    %286 = vector.broadcast %cst_81 : f32 to vector<6x5xf32>
    %287 = arith.select %285, %283, %286 : vector<6x5xi1>, vector<6x5xf32>
    %cst_82 = arith.constant dense<0xFF800000> : vector<6xf32>
    %288 = vector.multi_reduction <maximumf>, %287, %cst_82 [1] : vector<6x5xf32> to vector<6xf32>
    %289 = vector.shape_cast %288 : vector<6xf32> to vector<6x1xf32>
    %290 = vector.broadcast %289 : vector<6x1xf32> to vector<6x5xf32>
    %291 = arith.subf %287, %290 : vector<6x5xf32>
    %292 = math.exp %291 : vector<6x5xf32>
    %293 = arith.mulf %292, %7 : vector<6x5xf32>
    %cst_83 = arith.constant dense<0.000000e+00> : vector<6xf32>
    %294 = vector.multi_reduction <add>, %293, %cst_83 [1] : vector<6x5xf32> to vector<6xf32>
    %295 = vector.shape_cast %294 : vector<6xf32> to vector<6x1xf32>
    %cst_84 = arith.constant 0.000000e+00 : f32
    %296 = vector.broadcast %cst_84 : f32 to vector<6x1xf32>
    %297 = arith.cmpf oeq, %295, %296 : vector<6x1xf32>
    %cst_85 = arith.constant 1.000000e+00 : f32
    %298 = vector.broadcast %cst_85 : f32 to vector<6x1xf32>
    %299 = arith.select %297, %298, %295 : vector<6x1xi1>, vector<6x1xf32>
    %300 = vector.broadcast %299 : vector<6x1xf32> to vector<6x5xf32>
    %301 = arith.divf %293, %300 : vector<6x5xf32>
    %302 = arith.truncf %301 : vector<6x5xf32> to vector<6x5xbf16>
    %303 = arith.truncf %264 : vector<5x16xf32> to vector<5x16xbf16>
    %cst_86 = arith.constant dense<0.000000e+00> : vector<6x16xf32>
    %304 = tpu.matmul %302, %303, %cst_86 {dimension_numbers = #tpu.dot_dimension_numbers<[1], [0], [0], [1], [0, 0, 1, 1], [], []>} : vector<6x5xbf16>, vector<5x16xbf16>, vector<6x16xf32> -> vector<6x16xf32>
    %305 = vector.broadcast %268 : vector<1x16xf32> to vector<6x16xf32>
    %306 = arith.addf %304, %305 : vector<6x16xf32>
    %307 = vector.extract_strided_slice %171 {offsets = [0, 32], sizes = [6, 16], strides = [1, 1]} : vector<6x48xf32> to vector<6x16xf32>
    %308 = arith.addf %306, %307 : vector<6x16xf32>
    %309 = vector.extract_strided_slice %165 {offsets = [4, 0], sizes = [1, 16], strides = [1, 1]} : vector<8x16xf32> to vector<1x16xf32>
    %310 = vector.broadcast %309 : vector<1x16xf32> to vector<6x16xf32>
    %311 = arith.addf %308, %310 : vector<6x16xf32>
    %cst_87 = arith.constant 0.000000e+00 : f32
    %312 = vector.broadcast %cst_87 : f32 to vector<5x16xf32>
    %313 = arith.maximumf %263, %312 : vector<5x16xf32>
    %cst_88 = arith.constant 0.000000e+00 : f32
    %314 = vector.broadcast %cst_88 : f32 to vector<6x16xf32>
    %315 = arith.maximumf %311, %314 : vector<6x16xf32>
    %cst_89 = arith.constant 0.000000e+00 : f32
    %316 = vector.broadcast %cst_89 : f32 to vector<1x16xf32>
    %cst_90 = arith.constant 0.000000e+00 : f32
    %317 = vector.broadcast %cst_90 : f32 to vector<2x16xf32>
    %318 = tpu.concatenate %316, %315, %317, %313 in 0 : vector<1x16xf32>, vector<6x16xf32>, vector<2x16xf32>, vector<5x16xf32> -> vector<14x16xf32>
    %c0_91 = arith.constant 0 : index
    %c0_92 = arith.constant 0 : index
    %319 = vector.load %arg3[%c0_91, %c0_92] : memref<14x16xf32, #tpu.memory_space<vmem>>, vector<14x16xf32>
    tpu.vector_store %arg3[%c0_91, %c0_92], %318 {strides = array<i32>} : memref<14x16xf32, #tpu.memory_space<vmem>>, vector<14x16xf32>,
    return
  }
}

</mosaic_0001>

<llo_original>
// kernel: encode_graph.1
$region0: #{encode_graph.1}
  #allocation0 [shape = 'u32[]', space=smem, size = 0x4, offset = 0x4, fixed_abs, tag = 'smem constant byte address 0x4 - core index']
  #allocation1 [shape = 'u32[144,128]{1,0:T(1,128)}', space=vmem, size = 0x12000, scoped, tag = 'internal scratch']
  %s0 = inlined_call_operand.vmem [shape: f32[14,32], index: 0, kind: input, shape index: {}]
  %s1 = inlined_call_operand.vmem [shape: f32[24,8], index: 1, kind: input, shape index: {}]
  %s2 = inlined_call_operand.vmem [shape: f32[288,32], index: 2, kind: input, shape index: {}]
  %s3 = inlined_call_operand.hbm [shape: f32[14,16], index: 3, kind: output, shape index: {}]
  %s4 = sld [smem:[#allocation0]]
  $region22: #{encode_graph.1} parent=0
    _
  %s6 = ssub.s32 1, %s4
  %s7 = scalar_select 0, %s6, %s4
  $region1: #{encode_graph.1} parent=0
    #allocation2 [shape = 'u8[8192]{0}', space=vmem, size = 0x2000, scoped, tag = 'output window, operand 0, single buffered']
    #allocation3 [shape = 's32[1]{0}', space=sflag, size = 0x4, scoped, tag = 'scoped memory for encode_graph.1']
    %8 = vsyncpa [#allocation3], 0
    // Predicated region
    $region2: #{encode_graph.1} parent=1 // pred_check
      _
    $region3: #{encode_graph.1} parent=1 // pred_check_branch
      %10 = sbr.rel (0) target = $region5
    $region4: #{encode_graph.1} parent=1 // pred_region
      _
    $region5: #{encode_graph.1} parent=1 // pred_fallthru
      _
    // Predicated region
    $region6: #{encode_graph.1} parent=1 // pred_check
      _
    $region7: #{encode_graph.1} parent=1 // pred_check_branch
      %12 = sbr.rel (0) target = $region9
    $region8: #{encode_graph.1} parent=1 // pred_region
      _
    $region9: #{encode_graph.1} parent=1 // pred_fallthru
      _
    // Predicated region
    $region10: #{encode_graph.1} parent=1 // pred_check
      _
    $region11: #{encode_graph.1} parent=1 // pred_check_branch
      %14 = sbr.rel (0) target = $region13
    $region12: #{encode_graph.1} parent=1 // pred_region
      _
    $region13: #{encode_graph.1} parent=1 // pred_fallthru
      _
    %v16 = vld [vmem:[%s0] sm:$0x1f]
    %v17 = vld [vmem:[%s0 + $0x8] sm:$0x3f]
    %v18 = vld [vmem:[%s1] sm:$0xff]
    %v19 = vld [vmem:[%s1 + $0x8] sm:$0xff]
    %v20 = vld [vmem:[%s1 + $0x10] sm:$0xff]
    %v21 = vld [vmem:[%s2] sm:$0xff]
    %v22 = vld [vmem:[%s2 + $0x8] sm:$0xff]
    %v23 = vld [vmem:[%s2 + $0x10] sm:$0xff]
    %v24 = vld [vmem:[%s2 + $0x18] sm:$0xff]
    %v25 = vld [vmem:[%s2 + $0x20] sm:$0xff]
    %v26 = vld [vmem:[%s2 + $0x28] sm:$0xff]
    %v27 = vld [vmem:[%s2 + $0x30] sm:$0xff]
    %v28 = vld [vmem:[%s2 + $0x38] sm:$0xff]
    %v29 = vld [vmem:[%s2 + $0x40] sm:$0xff]
    %v30 = vld [vmem:[%s2 + $0x48] sm:$0xff]
    %v31 = vld [vmem:[%s2 + $0x50] sm:$0xff]
    %v32 = vld [vmem:[%s2 + $0x58] sm:$0xff]
    %v33 = vld [vmem:[%s2 + $0x60] sm:$0xff]
    %v34 = vld [vmem:[%s2 + $0x68] sm:$0xff]
    %v35 = vld [vmem:[%s2 + $0x70] sm:$0xff]
    %v36 = vld [vmem:[%s2 + $0x78] sm:$0xff]
    %v37 = vld [vmem:[%s2 + $0x80] sm:$0xff]
    %v38 = vld [vmem:[%s2 + $0x88] sm:$0xff]
    %v39 = vpack.c.bf16 %v16, %v16
    %v40 = vpack.c.bf16 %v22, %v21
    %v41 = vpack.c.bf16 %v24, %v23
    %v42 = vpack.c.bf16 %v26, %v25
    %v43 = vpack.c.bf16 %v28, %v27
    %v44 = vpack.c.bf16 %v30, %v29
    %vm45 = vcmask 261120
    %v47 = vsel %vm45, %v39, 0
    %v50 = vsel %vm45, %v40, 0
    %v53 = vsel %vm45, %v41, 0
    %v56 = vsel %vm45, %v42, 0
    %v59 = vsel %vm45, %v43, 0
    %v62 = vsel %vm45, %v44, 0
    %64 = vmatprep.subr.bf16.mxu0 0
    %65 = vmatpush1.bf16.xpose.msra.mxu0 %v50
    %66 = vmatprep.subr.bf16.mxu0 0
    %67 = vmatpush1.bf16.xpose.msra.mxu0 %v53
    %68 = vmatprep.subr.bf16.mxu0 0
    %69 = vmatpush1.bf16.xpose.msra.mxu0 %v56
    %70 = vmatprep.subr.bf16.mxu0 0
    %71 = vmatpush1.bf16.xpose.msra.mxu0 %v59
    %72 = vmatprep.subr.bf16.mxu0 0
    %73 = vmatpush1.bf16.xpose.msra.mxu0 %v62
    %74 = vmatprep.subr.bf16.mxu0 0
    %75 = vmatpush1.bf16.xpose.msra.mxu0 0
    %76 = vmatprep.subr.bf16.mxu0 0
    %77 = vmatpush1.bf16.xpose.msra.mxu0 0
    %78 = vmatprep.subr.bf16.mxu0 0
    %79 = vmatpush1.bf16.xpose.msra.mxu0 0
    %80 = vmatprep.subr.bf16.mxu0 0
    %81 = vmatpush1.bf16.xpose.msra.mxu0 0
    %82 = vmatprep.subr.bf16.mxu0 0
    %83 = vmatpush1.bf16.xpose.msra.mxu0 0
    %84 = vmatprep.subr.bf16.mxu0 0
    %85 = vmatpush1.bf16.xpose.msra.mxu0 0
    %86 = vmatprep.subr.bf16.mxu0 0
    %87 = vmatpush1.bf16.xpose.msra.mxu0 0
    %88 = vmatprep.subr.bf16.mxu0 0
    %89 = vmatpush1.bf16.xpose.msra.mxu0 0
    %90 = vmatprep.subr.bf16.mxu0 0
    %91 = vmatpush1.bf16.xpose.msra.mxu0 0
    %92 = vmatprep.subr.bf16.mxu0 0
    %93 = vmatpush1.bf16.xpose.msra.mxu0 0
    %94 = vmatprep.subr.bf16.mxu0 0
    %95 = vmatpush1.bf16.xpose.msra.mxu0 0
    %96 = vmatprep.mubr.bf16.mxu0 0
    %97 = vmatmul.mubr.bf16.gmra.mrb[0].mxu0 %v47
    %v98 = vpop.f32.mrb[0].mxu0
    %v99 = vadd.f32 0.0, %v98
    %v100 = vpop.f32.mrb[0].mxu0
    %v101 = vpop.f32.mrb[0].mxu0
    %v102 = vpop.f32.mrb[0].mxu0
    %103 = vdwg.mxu0
    %v104 = vpack.c.bf16 %v17, %v17
    %v105 = vpack.c.bf16 %v32, %v31
    %v106 = vpack.c.bf16 %v34, %v33
    %v107 = vpack.c.bf16 %v36, %v35
    %v109 = vsel %vm45, %v104, 0
    %v112 = vsel %vm45, %v105, 0
    %v115 = vsel %vm45, %v106, 0
    %v118 = vsel %vm45, %v107, 0
    %120 = vmatprep.subr.bf16.mxu0 0
    %121 = vmatpush1.bf16.xpose.msra.mxu0 %v112
    %122 = vmatprep.subr.bf16.mxu0 0
    %123 = vmatpush1.bf16.xpose.msra.mxu0 %v115
    %124 = vmatprep.subr.bf16.mxu0 0
    %125 = vmatpush1.bf16.xpose.msra.mxu0 %v118
    %126 = vmatprep.subr.bf16.mxu0 0
    %127 = vmatpush1.bf16.xpose.msra.mxu0 0
    %128 = vmatprep.subr.bf16.mxu0 0
    %129 = vmatpush1.bf16.xpose.msra.mxu0 0
    %130 = vmatprep.subr.bf16.mxu0 0
    %131 = vmatpush1.bf16.xpose.msra.mxu0 0
    %132 = vmatprep.subr.bf16.mxu0 0
    %133 = vmatpush1.bf16.xpose.msra.mxu0 0
    %134 = vmatprep.subr.bf16.mxu0 0
    %135 = vmatpush1.bf16.xpose.msra.mxu0 0
    %136 = vmatprep.subr.bf16.mxu0 0
    %137 = vmatpush1.bf16.xpose.msra.mxu0 0
    %138 = vmatprep.subr.bf16.mxu0 0
    %139 = vmatpush1.bf16.xpose.msra.mxu0 0
    %140 = vmatprep.subr.bf16.mxu0 0
    %141 = vmatpush1.bf16.xpose.msra.mxu0 0
    %142 = vmatprep.subr.bf16.mxu0 0
    %143 = vmatpush1.bf16.xpose.msra.mxu0 0
    %144 = vmatprep.subr.bf16.mxu0 0
    %145 = vmatpush1.bf16.xpose.msra.mxu0 0
    %146 = vmatprep.subr.bf16.mxu0 0
    %147 = vmatpush1.bf16.xpose.msra.mxu0 0
    %148 = vmatprep.subr.bf16.mxu0 0
    %149 = vmatpush1.bf16.xpose.msra.mxu0 0
    %150 = vmatprep.subr.bf16.mxu0 0
    %151 = vmatpush1.bf16.xpose.msra.mxu0 0
    %152 = vmatprep.mubr.bf16.mxu0 0
    %153 = vmatmul.mubr.bf16.gmra.mrb[0].mxu0 %v109
    %v154 = vpop.f32.mrb[0].mxu0
    %v155 = vadd.f32 0.0, %v154
    %v156 = vpop.f32.mrb[0].mxu0
    %v157 = vpop.f32.mrb[0].mxu0
    %v158 = vpop.f32.mrb[0].mxu0
    %159 = vdwg.mxu0
    %v160 = vpack.c.bf16 %v37, %v37
    %v161 = vpack.c.bf16 %v99, %v99
    %vm162 = vcmask 130048
    %v164 = vsel %vm162, %v160, 0
    %v167 = vsel %vm162, %v161, 0
    %169 = vmatprep.subr.bf16.mxu0 0
    %170 = vmatpush1.bf16.xpose.msra.mxu0 %v167
    %171 = vmatprep.subr.bf16.mxu0 0
    %172 = vmatpush1.bf16.xpose.msra.mxu0 0
    %173 = vmatprep.subr.bf16.mxu0 0
    %174 = vmatpush1.bf16.xpose.msra.mxu0 0
    %175 = vmatprep.subr.bf16.mxu0 0
    %176 = vmatpush1.bf16.xpose.msra.mxu0 0
    %177 = vmatprep.subr.bf16.mxu0 0
    %178 = vmatpush1.bf16.xpose.msra.mxu0 0
    %179 = vmatprep.subr.bf16.mxu0 0
    %180 = vmatpush1.bf16.xpose.msra.mxu0 0
    %181 = vmatprep.subr.bf16.mxu0 0
    %182 = vmatpush1.bf16.xpose.msra.mxu0 0
    %183 = vmatprep.subr.bf16.mxu0 0
    %184 = vmatpush1.bf16.xpose.msra.mxu0 0
    %185 = vmatprep.subr.bf16.mxu0 0
    %186 = vmatpush1.bf16.xpose.msra.mxu0 0
    %187 = vmatprep.subr.bf16.mxu0 0
    %188 = vmatpush1.bf16.xpose.msra.mxu0 0
    %189 = vmatprep.subr.bf16.mxu0 0
    %190 = vmatpush1.bf16.xpose.msra.mxu0 0
    %191 = vmatprep.subr.bf16.mxu0 0
    %192 = vmatpush1.bf16.xpose.msra.mxu0 0
    %193 = vmatprep.subr.bf16.mxu0 0
    %194 = vmatpush1.bf16.xpose.msra.mxu0 0
    %195 = vmatprep.subr.bf16.mxu0 0
    %196 = vmatpush1.bf16.xpose.msra.mxu0 0
    %197 = vmatprep.subr.bf16.mxu0 0
    %198 = vmatpush1.bf16.xpose.msra.mxu0 0
    %199 = vmatprep.subr.bf16.mxu0 0
    %200 = vmatpush1.bf16.xpose.msra.mxu0 0
    %201 = vmatprep.mubr.bf16.mxu0 0
    %202 = vmatmul.mubr.bf16.gmra.mrb[0].mxu0 %v164
    %v203 = vpop.f32.mrb[0].mxu0
    %v204 = vadd.f32 0.0, %v203
    %v205 = vpop.f32.mrb[0].mxu0
    %v206 = vpop.f32.mrb[0].mxu0
    %v207 = vpop.f32.mrb[0].mxu0
    %208 = vdwg.mxu0
    %v209 = vlaneseq
    %v210 = vshrl.u32 %v209, 7
    %v211 = vsub.s32 1, %v210
    %v212 = vrot.slane %v37, %v211
    %214 = vrot.lane.b32.xlu0 %v212, 16
    %v215 = vpop.permute.xlu0 %214
    %v217 = vmul.f32 %v99, %v215
    %219 = vrot.lane.b32.xlu0 %v217, 112
    %v220 = vpop.permute.xlu0 %219
    %vm222 = vcmask 126976
    %v223 = vsel %vm222, %v220, 0.0
    %224 = vadd.xlane.f32.xlu0 %v223
    %v225 = vpop.xlane.xlu0 %224
    %v226 = vlaneseq
    %v227 = vshrl.u32 %v226, 7
    %v228 = vsub.s32 0, %v227
    %v229 = vrot.slane %v204, %v228
    %v230 = vadd.f32 %v225, %v229
    %vm231 = vcmp.gt.f32.partialorder %v230, 0.0
    %v232 = vmul.f32 %v230, 0.2
    %v233 = vsel %vm231, %v230, %v232
    %vm234 = vcmp.gt.f32.partialorder %v18, 0.0
    %v235 = vsel %vm234, %v233, -1e+30
    %vm236 = vcmask 36864
    %v237 = vsel %vm236, %v235, -inf
    %238 = vmax.xlane.f32.xlu0 %v237
    %v239 = vpop.xlane.xlu0 %238
    %v240 = vsub.f32 %v235, %v239
    %v241 = vmul.f32 %v240, 1.442695
    %v242 = vpow.pop %v241
    %v243 = vmul.f32 %v242, %v18
    %v244 = vsel %vm236, %v243, 0.0
    %245 = vadd.xlane.f32.xlu0 %v244
    %v246 = vpop.xlane.xlu0 %245
    %vm247 = vcmp.eq.f32.partialorder %v246, 0.0
    %v248 = vsel %vm247, 1.0, %v246
    %v249 = vrcp.pop %v248
    %v250 = vmul.f32 %v243, %v249
    %v251 = vpack.c.bf16 %v250, %v250
    %v252 = vlaneseq
    %v253 = vshrl.u32 %v252, 7
    %v254 = vsub.s32 0, %v253
    %v255 = vrot.slane %v38, %v254
    %vm256 = vcmask 39936
    %v258 = vsel %vm256, %v251, 0
    %vm260 = vcmask 1041408
    %vm261 = vcmask 1042432
    %v262 = vsel %vm260, 4294967295, 65535
    %v263 = vsel %vm261, %v262, 0
    %v264 = vand.u32 %v161, %v263
    %266 = vmatprep.subr.bf16.mxu0 0
    %267 = vmatpush1.bf16.msra.mxu0 %v264
    %268 = vmatprep.subr.bf16.mxu0 0
    %269 = vmatpush1.bf16.msra.mxu0 0
    %270 = vmatprep.subr.bf16.mxu0 0
    %271 = vmatpush1.bf16.msra.mxu0 0
    %272 = vmatprep.subr.bf16.mxu0 0
    %273 = vmatpush1.bf16.msra.mxu0 0
    %274 = vmatprep.subr.bf16.mxu0 0
    %275 = vmatpush1.bf16.msra.mxu0 0
    %276 = vmatprep.subr.bf16.mxu0 0
    %277 = vmatpush1.bf16.msra.mxu0 0
    %278 = vmatprep.subr.bf16.mxu0 0
    %279 = vmatpush1.bf16.msra.mxu0 0
    %280 = vmatprep.subr.bf16.mxu0 0
    %281 = vmatpush1.bf16.msra.mxu0 0
    %282 = vmatprep.subr.bf16.mxu0 0
    %283 = vmatpush1.bf16.msra.mxu0 0
    %284 = vmatprep.subr.bf16.mxu0 0
    %285 = vmatpush1.bf16.msra.mxu0 0
    %286 = vmatprep.subr.bf16.mxu0 0
    %287 = vmatpush1.bf16.msra.mxu0 0
    %288 = vmatprep.subr.bf16.mxu0 0
    %289 = vmatpush1.bf16.msra.mxu0 0
    %290 = vmatprep.subr.bf16.mxu0 0
    %291 = vmatpush1.bf16.msra.mxu0 0
    %292 = vmatprep.subr.bf16.mxu0 0
    %293 = vmatpush1.bf16.msra.mxu0 0
    %294 = vmatprep.subr.bf16.mxu0 0
    %295 = vmatpush1.bf16.msra.mxu0 0
    %296 = vmatprep.subr.bf16.mxu0 0
    %297 = vmatpush1.bf16.msra.mxu0 0
    %298 = vmatprep.mubr.bf16.mxu0 0
    %299 = vmatmul.mubr.bf16.gmra.mrb[0].mxu0 %v258
    %v300 = vpop.f32.mrb[0].mxu0
    %v301 = vadd.f32 %v255, %v300
    %v302 = vpop.f32.mrb[0].mxu0
    %v303 = vpop.f32.mrb[0].mxu0
    %v304 = vpop.f32.mrb[0].mxu0
    %305 = vdwg.mxu0
    %v306 = vpack.c.bf16 %v155, %v155
    %v308 = vrot.slane %v160, 1
    %v310 = vsel %vm162, %v308, 0
    %v313 = vsel %vm162, %v306, 0
    %315 = vmatprep.subr.bf16.mxu0 0
    %316 = vmatpush1.bf16.xpose.msra.mxu0 %v313
    %317 = vmatprep.subr.bf16.mxu0 0
    %318 = vmatpush1.bf16.xpose.msra.mxu0 0
    %319 = vmatprep.subr.bf16.mxu0 0
    %320 = vmatpush1.bf16.xpose.msra.mxu0 0
    %321 = vmatprep.subr.bf16.mxu0 0
    %322 = vmatpush1.bf16.xpose.msra.mxu0 0
    %323 = vmatprep.subr.bf16.mxu0 0
    %324 = vmatpush1.bf16.xpose.msra.mxu0 0
    %325 = vmatprep.subr.bf16.mxu0 0
    %326 = vmatpush1.bf16.xpose.msra.mxu0 0
    %327 = vmatprep.subr.bf16.mxu0 0
    %328 = vmatpush1.bf16.xpose.msra.mxu0 0
    %329 = vmatprep.subr.bf16.mxu0 0
    %330 = vmatpush1.bf16.xpose.msra.mxu0 0
    %331 = vmatprep.subr.bf16.mxu0 0
    %332 = vmatpush1.bf16.xpose.msra.mxu0 0
    %333 = vmatprep.subr.bf16.mxu0 0
    %334 = vmatpush1.bf16.xpose.msra.mxu0 0
    %335 = vmatprep.subr.bf16.mxu0 0
    %336 = vmatpush1.bf16.xpose.msra.mxu0 0
    %337 = vmatprep.subr.bf16.mxu0 0
    %338 = vmatpush1.bf16.xpose.msra.mxu0 0
    %339 = vmatprep.subr.bf16.mxu0 0
    %340 = vmatpush1.bf16.xpose.msra.mxu0 0
    %341 = vmatprep.subr.bf16.mxu0 0
    %342 = vmatpush1.bf16.xpose.msra.mxu0 0
    %343 = vmatprep.subr.bf16.mxu0 0
    %344 = vmatpush1.bf16.xpose.msra.mxu0 0
    %345 = vmatprep.subr.bf16.mxu0 0
    %346 = vmatpush1.bf16.xpose.msra.mxu0 0
    %347 = vmatprep.mubr.bf16.mxu0 0
    %348 = vmatmul.mubr.bf16.gmra.mrb[0].mxu0 %v310
    %v349 = vpop.f32.mrb[0].mxu0
    %v350 = vadd.f32 0.0, %v349
    %v351 = vpop.f32.mrb[0].mxu0
    %v352 = vpop.f32.mrb[0].mxu0
    %v353 = vpop.f32.mrb[0].mxu0
    %354 = vdwg.mxu0
    %v355 = vlaneseq
    %v356 = vshrl.u32 %v355, 7
    %v357 = vsub.s32 3, %v356
    %v358 = vrot.slane %v37, %v357
    %360 = vrot.lane.b32.xlu0 %v358, 48
    %v361 = vpop.permute.xlu0 %360
    %v363 = vmul.f32 %v99, %v361
    %365 = vrot.lane.b32.xlu0 %v363, 80
    %v366 = vpop.permute.xlu0 %365
    %v368 = vsel %vm222, %v366, 0.0
    %369 = vadd.xlane.f32.xlu0 %v368
    %v370 = vpop.xlane.xlu0 %369
    %v371 = vlaneseq
    %v372 = vshrl.u32 %v371, 7
    %v373 = vsub.s32 0, %v372
    %v374 = vrot.slane %v350, %v373
    %v375 = vadd.f32 %v370, %v374
    %vm376 = vcmp.gt.f32.partialorder %v375, 0.0
    %v377 = vmul.f32 %v375, 0.2
    %v378 = vsel %vm376, %v375, %v377
    %vm379 = vcmp.gt.f32.partialorder %v19, 0.0
    %v380 = vsel %vm379, %v378, -1e+30
    %vm381 = vcmask 45056
    %v382 = vsel %vm381, %v380, -inf
    %383 = vmax.xlane.f32.xlu0 %v382
    %v384 = vpop.xlane.xlu0 %383
    %v385 = vsub.f32 %v380, %v384
    %v386 = vmul.f32 %v385, 1.442695
    %v387 = vpow.pop %v386
    %v388 = vmul.f32 %v387, %v19
    %v389 = vsel %vm381, %v388, 0.0
    %390 = vadd.xlane.f32.xlu0 %v389
    %v391 = vpop.xlane.xlu0 %390
    %vm392 = vcmp.eq.f32.partialorder %v391, 0.0
    %v393 = vsel %vm392, 1.0, %v391
    %v394 = vrcp.pop %v393
    %v395 = vmul.f32 %v388, %v394
    %v396 = vpack.c.bf16 %v395, %v395
    %v397 = vlaneseq
    %v398 = vshrl.u32 %v397, 7
    %v399 = vsub.s32 1, %v398
    %v400 = vrot.slane %v38, %v399
    %vm401 = vcmask 48128
    %v403 = vsel %vm401, %v396, 0
    %v405 = vsel %vm261, %v306, 0
    %407 = vmatprep.subr.bf16.mxu0 0
    %408 = vmatpush1.bf16.msra.mxu0 %v405
    %409 = vmatprep.subr.bf16.mxu0 0
    %410 = vmatpush1.bf16.msra.mxu0 0
    %411 = vmatprep.subr.bf16.mxu0 0
    %412 = vmatpush1.bf16.msra.mxu0 0
    %413 = vmatprep.subr.bf16.mxu0 0
    %414 = vmatpush1.bf16.msra.mxu0 0
    %415 = vmatprep.subr.bf16.mxu0 0
    %416 = vmatpush1.bf16.msra.mxu0 0
    %417 = vmatprep.subr.bf16.mxu0 0
    %418 = vmatpush1.bf16.msra.mxu0 0
    %419 = vmatprep.subr.bf16.mxu0 0
    %420 = vmatpush1.bf16.msra.mxu0 0
    %421 = vmatprep.subr.bf16.mxu0 0
    %422 = vmatpush1.bf16.msra.mxu0 0
    %423 = vmatprep.subr.bf16.mxu0 0
    %424 = vmatpush1.bf16.msra.mxu0 0
    %425 = vmatprep.subr.bf16.mxu0 0
    %426 = vmatpush1.bf16.msra.mxu0 0
    %427 = vmatprep.subr.bf16.mxu0 0
    %428 = vmatpush1.bf16.msra.mxu0 0
    %429 = vmatprep.subr.bf16.mxu0 0
    %430 = vmatpush1.bf16.msra.mxu0 0
    %431 = vmatprep.subr.bf16.mxu0 0
    %432 = vmatpush1.bf16.msra.mxu0 0
    %433 = vmatprep.subr.bf16.mxu0 0
    %434 = vmatpush1.bf16.msra.mxu0 0
    %435 = vmatprep.subr.bf16.mxu0 0
    %436 = vmatpush1.bf16.msra.mxu0 0
    %437 = vmatprep.subr.bf16.mxu0 0
    %438 = vmatpush1.bf16.msra.mxu0 0
    %439 = vmatprep.mubr.bf16.mxu0 0
    %440 = vmatmul.mubr.bf16.gmra.mrb[0].mxu0 %v403
    %v441 = vpop.f32.mrb[0].mxu0
    %v442 = vadd.f32 %v400, %v441
    %v443 = vpop.f32.mrb[0].mxu0
    %v444 = vpop.f32.mrb[0].mxu0
    %v445 = vpop.f32.mrb[0].mxu0
    %446 = vdwg.mxu0
    %v447 = vadd.f32 %v301, %v442
    %449 = vrot.lane.b32.xlu0 %v99, 64
    %v450 = vpop.permute.xlu0 %449
    %v452 = vadd.f32 %v447, %v450
    %v453 = vlaneseq
    %v454 = vshrl.u32 %v453, 7
    %v455 = vsub.s32 3, %v454
    %v456 = vrot.slane %v38, %v455
    %v457 = vadd.f32 %v452, %v456
    %v458 = vrot.slane %v160, 2
    %460 = vrot.lane.b32.xlu0 %v161, 96
    %v461 = vpop.permute.xlu0 %460
    %v463 = vsel %vm162, %v458, 0
    %v466 = vsel %vm162, %v461, 0
    %468 = vmatprep.subr.bf16.mxu0 0
    %469 = vmatpush1.bf16.xpose.msra.mxu0 %v466
    %470 = vmatprep.subr.bf16.mxu0 0
    %471 = vmatpush1.bf16.xpose.msra.mxu0 0
    %472 = vmatprep.subr.bf16.mxu0 0
    %473 = vmatpush1.bf16.xpose.msra.mxu0 0
    %474 = vmatprep.subr.bf16.mxu0 0
    %475 = vmatpush1.bf16.xpose.msra.mxu0 0
    %476 = vmatprep.subr.bf16.mxu0 0
    %477 = vmatpush1.bf16.xpose.msra.mxu0 0
    %478 = vmatprep.subr.bf16.mxu0 0
    %479 = vmatpush1.bf16.xpose.msra.mxu0 0
    %480 = vmatprep.subr.bf16.mxu0 0
    %481 = vmatpush1.bf16.xpose.msra.mxu0 0
    %482 = vmatprep.subr.bf16.mxu0 0
    %483 = vmatpush1.bf16.xpose.msra.mxu0 0
    %484 = vmatprep.subr.bf16.mxu0 0
    %485 = vmatpush1.bf16.xpose.msra.mxu0 0
    %486 = vmatprep.subr.bf16.mxu0 0
    %487 = vmatpush1.bf16.xpose.msra.mxu0 0
    %488 = vmatprep.subr.bf16.mxu0 0
    %489 = vmatpush1.bf16.xpose.msra.mxu0 0
    %490 = vmatprep.subr.bf16.mxu0 0
    %491 = vmatpush1.bf16.xpose.msra.mxu0 0
    %492 = vmatprep.subr.bf16.mxu0 0
    %493 = vmatpush1.bf16.xpose.msra.mxu0 0
    %494 = vmatprep.subr.bf16.mxu0 0
    %495 = vmatpush1.bf16.xpose.msra.mxu0 0
    %496 = vmatprep.subr.bf16.mxu0 0
    %497 = vmatpush1.bf16.xpose.msra.mxu0 0
    %498 = vmatprep.subr.bf16.mxu0 0
    %499 = vmatpush1.bf16.xpose.msra.mxu0 0
    %500 = vmatprep.mubr.bf16.mxu0 0
    %501 = vmatmul.mubr.bf16.gmra.mrb[0].mxu0 %v463
    %v502 = vpop.f32.mrb[0].mxu0
    %v503 = vadd.f32 0.0, %v502
    %v504 = vpop.f32.mrb[0].mxu0
    %v505 = vpop.f32.mrb[0].mxu0
    %v506 = vpop.f32.mrb[0].mxu0
    %507 = vdwg.mxu0
    %v508 = vlaneseq
    %v509 = vshrl.u32 %v508, 7
    %v510 = vsub.s32 5, %v509
    %v511 = vrot.slane %v37, %v510
    %513 = vrot.lane.b32.xlu0 %v511, 16
    %v514 = vpop.permute.xlu0 %513
    %v516 = vmul.f32 %v155, %v514
    %518 = vrot.lane.b32.xlu0 %v516, 112
    %v519 = vpop.permute.xlu0 %518
    %vm521 = vcmask 128000
    %v522 = vsel %vm521, %v519, 0.0
    %523 = vadd.xlane.f32.xlu0 %v522
    %v524 = vpop.xlane.xlu0 %523
    %v525 = vlaneseq
    %v526 = vshrl.u32 %v525, 7
    %v527 = vsub.s32 0, %v526
    %v528 = vrot.slane %v503, %v527
    %v529 = vadd.f32 %v524, %v528
    %vm530 = vcmp.gt.f32.partialorder %v529, 0.0
    %v531 = vmul.f32 %v529, 0.2
    %v532 = vsel %vm530, %v529, %v531
    %vm533 = vcmp.gt.f32.partialorder %v20, 0.0
    %v534 = vsel %vm533, %v532, -1e+30
    %vm535 = vcmask 37888
    %v536 = vsel %vm535, %v534, -inf
    %537 = vmax.xlane.f32.xlu0 %v536
    %v538 = vpop.xlane.xlu0 %537
    %v539 = vsub.f32 %v534, %v538
    %v540 = vmul.f32 %v539, 1.442695
    %v541 = vpow.pop %v540
    %v542 = vmul.f32 %v541, %v20
    %v543 = vsel %vm535, %v542, 0.0
    %544 = vadd.xlane.f32.xlu0 %v543
    %v545 = vpop.xlane.xlu0 %544
    %vm546 = vcmp.eq.f32.partialorder %v545, 0.0
    %v547 = vsel %vm546, 1.0, %v545
    %v548 = vrcp.pop %v547
    %v549 = vmul.f32 %v542, %v548
    %v550 = vpack.c.bf16 %v549, %v549
    %v551 = vlaneseq
    %v552 = vshrl.u32 %v551, 7
    %v553 = vsub.s32 2, %v552
    %v554 = vrot.slane %v38, %v553
    %v556 = vsel %vm256, %v550, 0
    %v558 = vand.u32 %v461, %v263
    %560 = vmatprep.subr.bf16.mxu0 0
    %561 = vmatpush1.bf16.msra.mxu0 %v558
    %562 = vmatprep.subr.bf16.mxu0 0
    %563 = vmatpush1.bf16.msra.mxu0 0
    %564 = vmatprep.subr.bf16.mxu0 0
    %565 = vmatpush1.bf16.msra.mxu0 0
    %566 = vmatprep.subr.bf16.mxu0 0
    %567 = vmatpush1.bf16.msra.mxu0 0
    %568 = vmatprep.subr.bf16.mxu0 0
    %569 = vmatpush1.bf16.msra.mxu0 0
    %570 = vmatprep.subr.bf16.mxu0 0
    %571 = vmatpush1.bf16.msra.mxu0 0
    %572 = vmatprep.subr.bf16.mxu0 0
    %573 = vmatpush1.bf16.msra.mxu0 0
    %574 = vmatprep.subr.bf16.mxu0 0
    %575 = vmatpush1.bf16.msra.mxu0 0
    %576 = vmatprep.subr.bf16.mxu0 0
    %577 = vmatpush1.bf16.msra.mxu0 0
    %578 = vmatprep.subr.bf16.mxu0 0
    %579 = vmatpush1.bf16.msra.mxu0 0
    %580 = vmatprep.subr.bf16.mxu0 0
    %581 = vmatpush1.bf16.msra.mxu0 0
    %582 = vmatprep.subr.bf16.mxu0 0
    %583 = vmatpush1.bf16.msra.mxu0 0
    %584 = vmatprep.subr.bf16.mxu0 0
    %585 = vmatpush1.bf16.msra.mxu0 0
    %586 = vmatprep.subr.bf16.mxu0 0
    %587 = vmatpush1.bf16.msra.mxu0 0
    %588 = vmatprep.subr.bf16.mxu0 0
    %589 = vmatpush1.bf16.msra.mxu0 0
    %590 = vmatprep.subr.bf16.mxu0 0
    %591 = vmatpush1.bf16.msra.mxu0 0
    %592 = vmatprep.mubr.bf16.mxu0 0
    %593 = vmatmul.mubr.bf16.gmra.mrb[0].mxu0 %v556
    %v594 = vpop.f32.mrb[0].mxu0
    %v595 = vadd.f32 %v554, %v594
    %v596 = vpop.f32.mrb[0].mxu0
    %v597 = vpop.f32.mrb[0].mxu0
    %v598 = vpop.f32.mrb[0].mxu0
    %599 = vdwg.mxu0
    %601 = vrot.lane.b32.xlu0 %v155, 96
    %v602 = vpop.permute.xlu0 %601
    %v604 = vadd.f32 %v595, %v602
    %v605 = vlaneseq
    %v606 = vshrl.u32 %v605, 7
    %v607 = vsub.s32 4, %v606
    %v608 = vrot.slane %v38, %v607
    %v609 = vadd.f32 %v604, %v608
    %v610 = vmax.f32 %v457, 0.0
    %v611 = vmax.f32 %v609, 0.0
    %v612 = vld [vmem:[%s2 + $0x90] sm:$0xff]
    %v613 = vld [vmem:[%s2 + $0x98] sm:$0xff]
    %v614 = vld [vmem:[%s2 + $0xa0] sm:$0xff]
    %v615 = vld [vmem:[%s2 + $0xa8] sm:$0xff]
    %v616 = vld [vmem:[%s2 + $0xb0] sm:$0xff]
    %v617 = vld [vmem:[%s2 + $0xb8] sm:$0xff]
    %v618 = vld [vmem:[%s2 + $0xc0] sm:$0xff]
    %v619 = vld [vmem:[%s2 + $0xc8] sm:$0xff]
    %v620 = vld [vmem:[%s2 + $0xd0] sm:$0xff]
    %v621 = vld [vmem:[%s2 + $0xd8] sm:$0xff]
    %v622 = vld [vmem:[%s2 + $0xe0] sm:$0xff]
    %v623 = vld [vmem:[%s2 + $0xe8] sm:$0xff]
    %v624 = vld [vmem:[%s2 + $0xf0] sm:$0xff]
    %v625 = vld [vmem:[%s2 + $0xf8] sm:$0xff]
    %v626 = vld [vmem:[%s2 + $0x100] sm:$0xff]
    %v627 = vld [vmem:[%s2 + $0x108] sm:$0xff]
    %v628 = vld [vmem:[%s2 + $0x110] sm:$0xff]
    %v629 = vld [vmem:[%s2 + $0x118] sm:$0xff]
    %v630 = vpack.c.bf16 %v610, %v610
    %v631 = vpack.c.bf16 %v613, %v612
    %v632 = vpack.c.bf16 %v615, %v614
    %v633 = vpack.c.bf16 %v617, %v616
    %v634 = vpack.c.bf16 %v619, %v618
    %v635 = vpack.c.bf16 %v621, %v620
    %v637 = vsel %vm162, %v630, 0
    %v640 = vsel %vm162, %v631, 0
    %v643 = vsel %vm162, %v632, 0
    %v646 = vsel %vm162, %v633, 0
    %v649 = vsel %vm162, %v634, 0
    %v652 = vsel %vm162, %v635, 0
    %654 = vmatprep.subr.bf16.mxu0 0
    %655 = vmatpush1.bf16.xpose.msra.mxu0 %v640
    %656 = vmatprep.subr.bf16.mxu0 0
    %657 = vmatpush1.bf16.xpose.msra.mxu0 %v643
    %658 = vmatprep.subr.bf16.mxu0 0
    %659 = vmatpush1.bf16.xpose.msra.mxu0 %v646
    %660 = vmatprep.subr.bf16.mxu0 0
    %661 = vmatpush1.bf16.xpose.msra.mxu0 %v649
    %662 = vmatprep.subr.bf16.mxu0 0
    %663 = vmatpush1.bf16.xpose.msra.mxu0 %v652
    %664 = vmatprep.subr.bf16.mxu0 0
    %665 = vmatpush1.bf16.xpose.msra.mxu0 0
    %666 = vmatprep.subr.bf16.mxu0 0
    %667 = vmatpush1.bf16.xpose.msra.mxu0 0
    %668 = vmatprep.subr.bf16.mxu0 0
    %669 = vmatpush1.bf16.xpose.msra.mxu0 0
    %670 = vmatprep.subr.bf16.mxu0 0
    %671 = vmatpush1.bf16.xpose.msra.mxu0 0
    %672 = vmatprep.subr.bf16.mxu0 0
    %673 = vmatpush1.bf16.xpose.msra.mxu0 0
    %674 = vmatprep.subr.bf16.mxu0 0
    %675 = vmatpush1.bf16.xpose.msra.mxu0 0
    %676 = vmatprep.subr.bf16.mxu0 0
    %677 = vmatpush1.bf16.xpose.msra.mxu0 0
    %678 = vmatprep.subr.bf16.mxu0 0
    %679 = vmatpush1.bf16.xpose.msra.mxu0 0
    %680 = vmatprep.subr.bf16.mxu0 0
    %681 = vmatpush1.bf16.xpose.msra.mxu0 0
    %682 = vmatprep.subr.bf16.mxu0 0
    %683 = vmatpush1.bf16.xpose.msra.mxu0 0
    %684 = vmatprep.subr.bf16.mxu0 0
    %685 = vmatpush1.bf16.xpose.msra.mxu0 0
    %686 = vmatprep.mubr.bf16.mxu0 0
    %687 = vmatmul.mubr.bf16.gmra.mrb[0].mxu0 %v637
    %v688 = vpop.f32.mrb[0].mxu0
    %v689 = vadd.f32 0.0, %v688
    %v690 = vpop.f32.mrb[0].mxu0
    %v691 = vpop.f32.mrb[0].mxu0
    %v692 = vpop.f32.mrb[0].mxu0
    %693 = vdwg.mxu0
    %v694 = vpack.c.bf16 %v611, %v611
    %v695 = vpack.c.bf16 %v623, %v622
    %v696 = vpack.c.bf16 %v625, %v624
    %v697 = vpack.c.bf16 %v627, %v626
    %v699 = vsel %vm162, %v694, 0
    %v702 = vsel %vm162, %v695, 0
    %v705 = vsel %vm162, %v696, 0
    %v708 = vsel %vm162, %v697, 0
    %710 = vmatprep.subr.bf16.mxu0 0
    %711 = vmatpush1.bf16.xpose.msra.mxu0 %v702
    %712 = vmatprep.subr.bf16.mxu0 0
    %713 = vmatpush1.bf16.xpose.msra.mxu0 %v705
    %714 = vmatprep.subr.bf16.mxu0 0
    %715 = vmatpush1.bf16.xpose.msra.mxu0 %v708
    %716 = vmatprep.subr.bf16.mxu0 0
    %717 = vmatpush1.bf16.xpose.msra.mxu0 0
    %718 = vmatprep.subr.bf16.mxu0 0
    %719 = vmatpush1.bf16.xpose.msra.mxu0 0
    %720 = vmatprep.subr.bf16.mxu0 0
    %721 = vmatpush1.bf16.xpose.msra.mxu0 0
    %722 = vmatprep.subr.bf16.mxu0 0
    %723 = vmatpush1.bf16.xpose.msra.mxu0 0
    %724 = vmatprep.subr.bf16.mxu0 0
    %725 = vmatpush1.bf16.xpose.msra.mxu0 0
    %726 = vmatprep.subr.bf16.mxu0 0
    %727 = vmatpush1.bf16.xpose.msra.mxu0 0
    %728 = vmatprep.subr.bf16.mxu0 0
    %729 = vmatpush1.bf16.xpose.msra.mxu0 0
    %730 = vmatprep.subr.bf16.mxu0 0
    %731 = vmatpush1.bf16.xpose.msra.mxu0 0
    %732 = vmatprep.subr.bf16.mxu0 0
    %733 = vmatpush1.bf16.xpose.msra.mxu0 0
    %734 = vmatprep.subr.bf16.mxu0 0
    %735 = vmatpush1.bf16.xpose.msra.mxu0 0
    %736 = vmatprep.subr.bf16.mxu0 0
    %737 = vmatpush1.bf16.xpose.msra.mxu0 0
    %738 = vmatprep.subr.bf16.mxu0 0
    %739 = vmatpush1.bf16.xpose.msra.mxu0 0
    %740 = vmatprep.subr.bf16.mxu0 0
    %741 = vmatpush1.bf16.xpose.msra.mxu0 0
    %742 = vmatprep.mubr.bf16.mxu0 0
    %743 = vmatmul.mubr.bf16.gmra.mrb[0].mxu0 %v699
    %v744 = vpop.f32.mrb[0].mxu0
    %v745 = vadd.f32 0.0, %v744
    %v746 = vpop.f32.mrb[0].mxu0
    %v747 = vpop.f32.mrb[0].mxu0
    %v748 = vpop.f32.mrb[0].mxu0
    %749 = vdwg.mxu0
    %v750 = vpack.c.bf16 %v628, %v628
    %v751 = vpack.c.bf16 %v689, %v689
    %v753 = vsel %vm162, %v750, 0
    %v756 = vsel %vm162, %v751, 0
    %758 = vmatprep.subr.bf16.mxu0 0
    %759 = vmatpush1.bf16.xpose.msra.mxu0 %v756
    %760 = vmatprep.subr.bf16.mxu0 0
    %761 = vmatpush1.bf16.xpose.msra.mxu0 0
    %762 = vmatprep.subr.bf16.mxu0 0
    %763 = vmatpush1.bf16.xpose.msra.mxu0 0
    %764 = vmatprep.subr.bf16.mxu0 0
    %765 = vmatpush1.bf16.xpose.msra.mxu0 0
    %766 = vmatprep.subr.bf16.mxu0 0
    %767 = vmatpush1.bf16.xpose.msra.mxu0 0
    %768 = vmatprep.subr.bf16.mxu0 0
    %769 = vmatpush1.bf16.xpose.msra.mxu0 0
    %770 = vmatprep.subr.bf16.mxu0 0
    %771 = vmatpush1.bf16.xpose.msra.mxu0 0
    %772 = vmatprep.subr.bf16.mxu0 0
    %773 = vmatpush1.bf16.xpose.msra.mxu0 0
    %774 = vmatprep.subr.bf16.mxu0 0
    %775 = vmatpush1.bf16.xpose.msra.mxu0 0
    %776 = vmatprep.subr.bf16.mxu0 0
    %777 = vmatpush1.bf16.xpose.msra.mxu0 0
    %778 = vmatprep.subr.bf16.mxu0 0
    %779 = vmatpush1.bf16.xpose.msra.mxu0 0
    %780 = vmatprep.subr.bf16.mxu0 0
    %781 = vmatpush1.bf16.xpose.msra.mxu0 0
    %782 = vmatprep.subr.bf16.mxu0 0
    %783 = vmatpush1.bf16.xpose.msra.mxu0 0
    %784 = vmatprep.subr.bf16.mxu0 0
    %785 = vmatpush1.bf16.xpose.msra.mxu0 0
    %786 = vmatprep.subr.bf16.mxu0 0
    %787 = vmatpush1.bf16.xpose.msra.mxu0 0
    %788 = vmatprep.subr.bf16.mxu0 0
    %789 = vmatpush1.bf16.xpose.msra.mxu0 0
    %790 = vmatprep.mubr.bf16.mxu0 0
    %791 = vmatmul.mubr.bf16.gmra.mrb[0].mxu0 %v753
    %v792 = vpop.f32.mrb[0].mxu0
    %v793 = vadd.f32 0.0, %v792
    %v794 = vpop.f32.mrb[0].mxu0
    %v795 = vpop.f32.mrb[0].mxu0
    %v796 = vpop.f32.mrb[0].mxu0
    %797 = vdwg.mxu0
    %v798 = vlaneseq
    %v799 = vshrl.u32 %v798, 7
    %v800 = vsub.s32 1, %v799
    %v801 = vrot.slane %v628, %v800
    %803 = vrot.lane.b32.xlu0 %v801, 16
    %v804 = vpop.permute.xlu0 %803
    %v806 = vmul.f32 %v689, %v804
    %808 = vrot.lane.b32.xlu0 %v806, 112
    %v809 = vpop.permute.xlu0 %808
    %v811 = vsel %vm222, %v809, 0.0
    %812 = vadd.xlane.f32.xlu0 %v811
    %v813 = vpop.xlane.xlu0 %812
    %v814 = vlaneseq
    %v815 = vshrl.u32 %v814, 7
    %v816 = vsub.s32 0, %v815
    %v817 = vrot.slane %v793, %v816
    %v818 = vadd.f32 %v813, %v817
    %vm819 = vcmp.gt.f32.partialorder %v818, 0.0
    %v820 = vmul.f32 %v818, 0.2
    %v821 = vsel %vm819, %v818, %v820
    %v822 = vsel %vm234, %v821, -1e+30
    %v823 = vsel %vm236, %v822, -inf
    %824 = vmax.xlane.f32.xlu0 %v823
    %v825 = vpop.xlane.xlu0 %824
    %v826 = vsub.f32 %v822, %v825
    %v827 = vmul.f32 %v826, 1.442695
    %v828 = vpow.pop %v827
    %v829 = vmul.f32 %v828, %v18
    %v830 = vsel %vm236, %v829, 0.0
    %831 = vadd.xlane.f32.xlu0 %v830
    %v832 = vpop.xlane.xlu0 %831
    %vm833 = vcmp.eq.f32.partialorder %v832, 0.0
    %v834 = vsel %vm833, 1.0, %v832
    %v835 = vrcp.pop %v834
    %v836 = vmul.f32 %v829, %v835
    %v837 = vpack.c.bf16 %v836, %v836
    %v838 = vlaneseq
    %v839 = vshrl.u32 %v838, 7
    %v840 = vsub.s32 0, %v839
    %v841 = vrot.slane %v629, %v840
    %v843 = vsel %vm256, %v837, 0
    %v845 = vand.u32 %v751, %v263
    %847 = vmatprep.subr.bf16.mxu0 0
    %848 = vmatpush1.bf16.msra.mxu0 %v845
    %849 = vmatprep.subr.bf16.mxu0 0
    %850 = vmatpush1.bf16.msra.mxu0 0
    %851 = vmatprep.subr.bf16.mxu0 0
    %852 = vmatpush1.bf16.msra.mxu0 0
    %853 = vmatprep.subr.bf16.mxu0 0
    %854 = vmatpush1.bf16.msra.mxu0 0
    %855 = vmatprep.subr.bf16.mxu0 0
    %856 = vmatpush1.bf16.msra.mxu0 0
    %857 = vmatprep.subr.bf16.mxu0 0
    %858 = vmatpush1.bf16.msra.mxu0 0
    %859 = vmatprep.subr.bf16.mxu0 0
    %860 = vmatpush1.bf16.msra.mxu0 0
    %861 = vmatprep.subr.bf16.mxu0 0
    %862 = vmatpush1.bf16.msra.mxu0 0
    %863 = vmatprep.subr.bf16.mxu0 0
    %864 = vmatpush1.bf16.msra.mxu0 0
    %865 = vmatprep.subr.bf16.mxu0 0
    %866 = vmatpush1.bf16.msra.mxu0 0
    %867 = vmatprep.subr.bf16.mxu0 0
    %868 = vmatpush1.bf16.msra.mxu0 0
    %869 = vmatprep.subr.bf16.mxu0 0
    %870 = vmatpush1.bf16.msra.mxu0 0
    %871 = vmatprep.subr.bf16.mxu0 0
    %872 = vmatpush1.bf16.msra.mxu0 0
    %873 = vmatprep.subr.bf16.mxu0 0
    %874 = vmatpush1.bf16.msra.mxu0 0
    %875 = vmatprep.subr.bf16.mxu0 0
    %876 = vmatpush1.bf16.msra.mxu0 0
    %877 = vmatprep.subr.bf16.mxu0 0
    %878 = vmatpush1.bf16.msra.mxu0 0
    %879 = vmatprep.mubr.bf16.mxu0 0
    %880 = vmatmul.mubr.bf16.gmra.mrb[0].mxu0 %v843
    %v881 = vpop.f32.mrb[0].mxu0
    %v882 = vadd.f32 %v841, %v881
    %v883 = vpop.f32.mrb[0].mxu0
    %v884 = vpop.f32.mrb[0].mxu0
    %v885 = vpop.f32.mrb[0].mxu0
    %886 = vdwg.mxu0
    %v887 = vpack.c.bf16 %v745, %v745
    %v889 = vrot.slane %v750, 1
    %v891 = vsel %vm162, %v889, 0
    %v894 = vsel %vm162, %v887, 0
    %896 = vmatprep.subr.bf16.mxu0 0
    %897 = vmatpush1.bf16.xpose.msra.mxu0 %v894
    %898 = vmatprep.subr.bf16.mxu0 0
    %899 = vmatpush1.bf16.xpose.msra.mxu0 0
    %900 = vmatprep.subr.bf16.mxu0 0
    %901 = vmatpush1.bf16.xpose.msra.mxu0 0
    %902 = vmatprep.subr.bf16.mxu0 0
    %903 = vmatpush1.bf16.xpose.msra.mxu0 0
    %904 = vmatprep.subr.bf16.mxu0 0
    %905 = vmatpush1.bf16.xpose.msra.mxu0 0
    %906 = vmatprep.subr.bf16.mxu0 0
    %907 = vmatpush1.bf16.xpose.msra.mxu0 0
    %908 = vmatprep.subr.bf16.mxu0 0
    %909 = vmatpush1.bf16.xpose.msra.mxu0 0
    %910 = vmatprep.subr.bf16.mxu0 0
    %911 = vmatpush1.bf16.xpose.msra.mxu0 0
    %912 = vmatprep.subr.bf16.mxu0 0
    %913 = vmatpush1.bf16.xpose.msra.mxu0 0
    %914 = vmatprep.subr.bf16.mxu0 0
    %915 = vmatpush1.bf16.xpose.msra.mxu0 0
    %916 = vmatprep.subr.bf16.mxu0 0
    %917 = vmatpush1.bf16.xpose.msra.mxu0 0
    %918 = vmatprep.subr.bf16.mxu0 0
    %919 = vmatpush1.bf16.xpose.msra.mxu0 0
    %920 = vmatprep.subr.bf16.mxu0 0
    %921 = vmatpush1.bf16.xpose.msra.mxu0 0
    %922 = vmatprep.subr.bf16.mxu0 0
    %923 = vmatpush1.bf16.xpose.msra.mxu0 0
    %924 = vmatprep.subr.bf16.mxu0 0
    %925 = vmatpush1.bf16.xpose.msra.mxu0 0
    %926 = vmatprep.subr.bf16.mxu0 0
    %927 = vmatpush1.bf16.xpose.msra.mxu0 0
    %928 = vmatprep.mubr.bf16.mxu0 0
    %929 = vmatmul.mubr.bf16.gmra.mrb[0].mxu0 %v891
    %v930 = vpop.f32.mrb[0].mxu0
    %v931 = vadd.f32 0.0, %v930
    %v932 = vpop.f32.mrb[0].mxu0
    %v933 = vpop.f32.mrb[0].mxu0
    %v934 = vpop.f32.mrb[0].mxu0
    %935 = vdwg.mxu0
    %v936 = vlaneseq
    %v937 = vshrl.u32 %v936, 7
    %v938 = vsub.s32 3, %v937
    %v939 = vrot.slane %v628, %v938
    %941 = vrot.lane.b32.xlu0 %v939, 48
    %v942 = vpop.permute.xlu0 %941
    %v944 = vmul.f32 %v689, %v942
    %946 = vrot.lane.b32.xlu0 %v944, 80
    %v947 = vpop.permute.xlu0 %946
    %v949 = vsel %vm222, %v947, 0.0
    %950 = vadd.xlane.f32.xlu0 %v949
    %v951 = vpop.xlane.xlu0 %950
    %v952 = vlaneseq
    %v953 = vshrl.u32 %v952, 7
    %v954 = vsub.s32 0, %v953
    %v955 = vrot.slane %v931, %v954
    %v956 = vadd.f32 %v951, %v955
    %vm957 = vcmp.gt.f32.partialorder %v956, 0.0
    %v958 = vmul.f32 %v956, 0.2
    %v959 = vsel %vm957, %v956, %v958
    %v960 = vsel %vm379, %v959, -1e+30
    %v961 = vsel %vm381, %v960, -inf
    %962 = vmax.xlane.f32.xlu0 %v961
    %v963 = vpop.xlane.xlu0 %962
    %v964 = vsub.f32 %v960, %v963
    %v965 = vmul.f32 %v964, 1.442695
    %v966 = vpow.pop %v965
    %v967 = vmul.f32 %v966, %v19
    %v968 = vsel %vm381, %v967, 0.0
    %969 = vadd.xlane.f32.xlu0 %v968
    %v970 = vpop.xlane.xlu0 %969
    %vm971 = vcmp.eq.f32.partialorder %v970, 0.0
    %v972 = vsel %vm971, 1.0, %v970
    %v973 = vrcp.pop %v972
    %v974 = vmul.f32 %v967, %v973
    %v975 = vpack.c.bf16 %v974, %v974
    %v976 = vlaneseq
    %v977 = vshrl.u32 %v976, 7
    %v978 = vsub.s32 1, %v977
    %v979 = vrot.slane %v629, %v978
    %v981 = vsel %vm401, %v975, 0
    %v983 = vsel %vm261, %v887, 0
    %985 = vmatprep.subr.bf16.mxu0 0
    %986 = vmatpush1.bf16.msra.mxu0 %v983
    %987 = vmatprep.subr.bf16.mxu0 0
    %988 = vmatpush1.bf16.msra.mxu0 0
    %989 = vmatprep.subr.bf16.mxu0 0
    %990 = vmatpush1.bf16.msra.mxu0 0
    %991 = vmatprep.subr.bf16.mxu0 0
    %992 = vmatpush1.bf16.msra.mxu0 0
    %993 = vmatprep.subr.bf16.mxu0 0
    %994 = vmatpush1.bf16.msra.mxu0 0
    %995 = vmatprep.subr.bf16.mxu0 0
    %996 = vmatpush1.bf16.msra.mxu0 0
    %997 = vmatprep.subr.bf16.mxu0 0
    %998 = vmatpush1.bf16.msra.mxu0 0
    %999 = vmatprep.subr.bf16.mxu0 0
    %1000 = vmatpush1.bf16.msra.mxu0 0
    %1001 = vmatprep.subr.bf16.mxu0 0
    %1002 = vmatpush1.bf16.msra.mxu0 0
    %1003 = vmatprep.subr.bf16.mxu0 0
    %1004 = vmatpush1.bf16.msra.mxu0 0
    %1005 = vmatprep.subr.bf16.mxu0 0
    %1006 = vmatpush1.bf16.msra.mxu0 0
    %1007 = vmatprep.subr.bf16.mxu0 0
    %1008 = vmatpush1.bf16.msra.mxu0 0
    %1009 = vmatprep.subr.bf16.mxu0 0
    %1010 = vmatpush1.bf16.msra.mxu0 0
    %1011 = vmatprep.subr.bf16.mxu0 0
    %1012 = vmatpush1.bf16.msra.mxu0 0
    %1013 = vmatprep.subr.bf16.mxu0 0
    %1014 = vmatpush1.bf16.msra.mxu0 0
    %1015 = vmatprep.subr.bf16.mxu0 0
    %1016 = vmatpush1.bf16.msra.mxu0 0
    %1017 = vmatprep.mubr.bf16.mxu0 0
    %1018 = vmatmul.mubr.bf16.gmra.mrb[0].mxu0 %v981
    %v1019 = vpop.f32.mrb[0].mxu0
    %v1020 = vadd.f32 %v979, %v1019
    %v1021 = vpop.f32.mrb[0].mxu0
    %v1022 = vpop.f32.mrb[0].mxu0
    %v1023 = vpop.f32.mrb[0].mxu0
    %1024 = vdwg.mxu0
    %v1025 = vadd.f32 %v882, %v1020
    %1027 = vrot.lane.b32.xlu0 %v689, 64
    %v1028 = vpop.permute.xlu0 %1027
    %v1030 = vadd.f32 %v1025, %v1028
    %v1031 = vlaneseq
    %v1032 = vshrl.u32 %v1031, 7
    %v1033 = vsub.s32 3, %v1032
    %v1034 = vrot.slane %v629, %v1033
    %v1035 = vadd.f32 %v1030, %v1034
    %v1036 = vrot.slane %v750, 2
    %1038 = vrot.lane.b32.xlu0 %v751, 96
    %v1039 = vpop.permute.xlu0 %1038
    %v1041 = vsel %vm162, %v1036, 0
    %v1044 = vsel %vm162, %v1039, 0
    %1046 = vmatprep.subr.bf16.mxu0 0
    %1047 = vmatpush1.bf16.xpose.msra.mxu0 %v1044
    %1048 = vmatprep.subr.bf16.mxu0 0
    %1049 = vmatpush1.bf16.xpose.msra.mxu0 0
    %1050 = vmatprep.subr.bf16.mxu0 0
    %1051 = vmatpush1.bf16.xpose.msra.mxu0 0
    %1052 = vmatprep.subr.bf16.mxu0 0
    %1053 = vmatpush1.bf16.xpose.msra.mxu0 0
    %1054 = vmatprep.subr.bf16.mxu0 0
    %1055 = vmatpush1.bf16.xpose.msra.mxu0 0
    %1056 = vmatprep.subr.bf16.mxu0 0
    %1057 = vmatpush1.bf16.xpose.msra.mxu0 0
    %1058 = vmatprep.subr.bf16.mxu0 0
    %1059 = vmatpush1.bf16.xpose.msra.mxu0 0
    %1060 = vmatprep.subr.bf16.mxu0 0
    %1061 = vmatpush1.bf16.xpose.msra.mxu0 0
    %1062 = vmatprep.subr.bf16.mxu0 0
    %1063 = vmatpush1.bf16.xpose.msra.mxu0 0
    %1064 = vmatprep.subr.bf16.mxu0 0
    %1065 = vmatpush1.bf16.xpose.msra.mxu0 0
    %1066 = vmatprep.subr.bf16.mxu0 0
    %1067 = vmatpush1.bf16.xpose.msra.mxu0 0
    %1068 = vmatprep.subr.bf16.mxu0 0
    %1069 = vmatpush1.bf16.xpose.msra.mxu0 0
    %1070 = vmatprep.subr.bf16.mxu0 0
    %1071 = vmatpush1.bf16.xpose.msra.mxu0 0
    %1072 = vmatprep.subr.bf16.mxu0 0
    %1073 = vmatpush1.bf16.xpose.msra.mxu0 0
    %1074 = vmatprep.subr.bf16.mxu0 0
    %1075 = vmatpush1.bf16.xpose.msra.mxu0 0
    %1076 = vmatprep.subr.bf16.mxu0 0
    %1077 = vmatpush1.bf16.xpose.msra.mxu0 0
    %1078 = vmatprep.mubr.bf16.mxu0 0
    %1079 = vmatmul.mubr.bf16.gmra.mrb[0].mxu0 %v1041
    %v1080 = vpop.f32.mrb[0].mxu0
    %v1081 = vadd.f32 0.0, %v1080
    %v1082 = vpop.f32.mrb[0].mxu0
    %v1083 = vpop.f32.mrb[0].mxu0
    %v1084 = vpop.f32.mrb[0].mxu0
    %1085 = vdwg.mxu0
    %v1086 = vlaneseq
    %v1087 = vshrl.u32 %v1086, 7
    %v1088 = vsub.s32 5, %v1087
    %v1089 = vrot.slane %v628, %v1088
    %1091 = vrot.lane.b32.xlu0 %v1089, 16
    %v1092 = vpop.permute.xlu0 %1091
    %v1094 = vmul.f32 %v745, %v1092
    %1096 = vrot.lane.b32.xlu0 %v1094, 112
    %v1097 = vpop.permute.xlu0 %1096
    %v1099 = vsel %vm521, %v1097, 0.0
    %1100 = vadd.xlane.f32.xlu0 %v1099
    %v1101 = vpop.xlane.xlu0 %1100
    %v1102 = vlaneseq
    %v1103 = vshrl.u32 %v1102, 7
    %v1104 = vsub.s32 0, %v1103
    %v1105 = vrot.slane %v1081, %v1104
    %v1106 = vadd.f32 %v1101, %v1105
    %vm1107 = vcmp.gt.f32.partialorder %v1106, 0.0
    %v1108 = vmul.f32 %v1106, 0.2
    %v1109 = vsel %vm1107, %v1106, %v1108
    %v1110 = vsel %vm533, %v1109, -1e+30
    %v1111 = vsel %vm535, %v1110, -inf
    %1112 = vmax.xlane.f32.xlu0 %v1111
    %v1113 = vpop.xlane.xlu0 %1112
    %v1114 = vsub.f32 %v1110, %v1113
    %v1115 = vmul.f32 %v1114, 1.442695
    %v1116 = vpow.pop %v1115
    %v1117 = vmul.f32 %v1116, %v20
    %v1118 = vsel %vm535, %v1117, 0.0
    %1119 = vadd.xlane.f32.xlu0 %v1118
    %v1120 = vpop.xlane.xlu0 %1119
    %vm1121 = vcmp.eq.f32.partialorder %v1120, 0.0
    %v1122 = vsel %vm1121, 1.0, %v1120
    %v1123 = vrcp.pop %v1122
    %v1124 = vmul.f32 %v1117, %v1123
    %v1125 = vpack.c.bf16 %v1124, %v1124
    %v1126 = vlaneseq
    %v1127 = vshrl.u32 %v1126, 7
    %v1128 = vsub.s32 2, %v1127
    %v1129 = vrot.slane %v629, %v1128
    %v1131 = vsel %vm256, %v1125, 0
    %v1133 = vand.u32 %v1039, %v263
    %1135 = vmatprep.subr.bf16.mxu0 0
    %1136 = vmatpush1.bf16.msra.mxu0 %v1133
    %1137 = vmatprep.subr.bf16.mxu0 0
    %1138 = vmatpush1.bf16.msra.mxu0 0
    %1139 = vmatprep.subr.bf16.mxu0 0
    %1140 = vmatpush1.bf16.msra.mxu0 0
    %1141 = vmatprep.subr.bf16.mxu0 0
    %1142 = vmatpush1.bf16.msra.mxu0 0
    %1143 = vmatprep.subr.bf16.mxu0 0
    %1144 = vmatpush1.bf16.msra.mxu0 0
    %1145 = vmatprep.subr.bf16.mxu0 0
    %1146 = vmatpush1.bf16.msra.mxu0 0
    %1147 = vmatprep.subr.bf16.mxu0 0
    %1148 = vmatpush1.bf16.msra.mxu0 0
    %1149 = vmatprep.subr.bf16.mxu0 0
    %1150 = vmatpush1.bf16.msra.mxu0 0
    %1151 = vmatprep.subr.bf16.mxu0 0
    %1152 = vmatpush1.bf16.msra.mxu0 0
    %1153 = vmatprep.subr.bf16.mxu0 0
    %1154 = vmatpush1.bf16.msra.mxu0 0
    %1155 = vmatprep.subr.bf16.mxu0 0
    %1156 = vmatpush1.bf16.msra.mxu0 0
    %1157 = vmatprep.subr.bf16.mxu0 0
    %1158 = vmatpush1.bf16.msra.mxu0 0
    %1159 = vmatprep.subr.bf16.mxu0 0
    %1160 = vmatpush1.bf16.msra.mxu0 0
    %1161 = vmatprep.subr.bf16.mxu0 0
    %1162 = vmatpush1.bf16.msra.mxu0 0
    %1163 = vmatprep.subr.bf16.mxu0 0
    %1164 = vmatpush1.bf16.msra.mxu0 0
    %1165 = vmatprep.subr.bf16.mxu0 0
    %1166 = vmatpush1.bf16.msra.mxu0 0
    %1167 = vmatprep.mubr.bf16.mxu0 0
    %1168 = vmatmul.mubr.bf16.gmra.mrb[0].mxu0 %v1131
    %v1169 = vpop.f32.mrb[0].mxu0
    %v1170 = vadd.f32 %v1129, %v1169
    %v1171 = vpop.f32.mrb[0].mxu0
    %v1172 = vpop.f32.mrb[0].mxu0
    %v1173 = vpop.f32.mrb[0].mxu0
    %1174 = vdwg.mxu0
    %1176 = vrot.lane.b32.xlu0 %v745, 96
    %v1177 = vpop.permute.xlu0 %1176
    %v1179 = vadd.f32 %v1170, %v1177
    %v1180 = vlaneseq
    %v1181 = vshrl.u32 %v1180, 7
    %v1182 = vsub.s32 4, %v1181
    %v1183 = vrot.slane %v629, %v1182
    %v1184 = vadd.f32 %v1179, %v1183
    %v1185 = vmax.f32 %v1035, 0.0
    %v1186 = vmax.f32 %v1184, 0.0
    %v1188 = vrot.slane %v1186, 7
    %v1191 = vrot.slane %v1185, 7
    %vm1193 = vcmask 1040384
    %v1194 = vsel %vm1193, 0.0, %v1188
    %vm1195 = vcmask 1046528
    %v1196 = vsel %vm1195, %v1194, 0.0
    %v1197 = vsel %vm1193, 0.0, %v1191
    %1198 = vst.msk [vmem:[#allocation2] sm:$0xff] %vm162, %v1196
    %1199 = vst.msk [vmem:[#allocation2 + $0x8] sm:$0x3f] %vm521, %v1197
    // Predicated region
    $region14: #{encode_graph.1} parent=1 // pred_check
      _
    $region15: #{encode_graph.1} parent=1 // pred_check_branch
      %1201 = sbr.rel (0) target = $region17
    $region16: #{encode_graph.1} parent=1 // pred_region
      %s1203 = ssub.s32 256, 256
      %1204 = vsyncadd [#allocation3], %s1203
      %s1205 = sshll.u32 [#allocation2], 4
      %s1206 = int_to_ptr.vmem [resolvable:$true] %s1205
      %1211 = dma.vmem_to_hbm [thread:$0]  %s1206, 256, %s3, [#allocation3], 128, 128, 8
    $region17: #{encode_graph.1} parent=1 // pred_fallthru
      _
    // Predicated region
    $region18: #{encode_graph.1} parent=1 // pred_check
      _
    $region19: #{encode_graph.1} parent=1 // pred_check_branch
      %1213 = sbr.rel (0) target = $region21
    $region20: #{encode_graph.1} parent=1 // pred_region
      %1214 = dma.done [#allocation3], 256
    $region21: #{encode_graph.1} parent=1 // pred_fallthru
      _
    %1215 = vsyncpa [#allocation3], 1

</llo_original>
